<compile_context>
chip_gen: v7x
topology: tpu7x:2x2x1
jax: 0.10.0
libtpu: 0.0.40
codegen_flags: <defaults>
</compile_context>

<pallas_src>
import math

import jax
import jax.numpy as jnp
from jax.experimental import pallas as pl
from jax.experimental.pallas import tpu as pltpu


def ghostconv_kernel(x_ref, xh_ref, w1_ref, b1_ref, wdw_ref, b2_ref,
                     out_ref, yp_ref):
    # x_ref:  (1, TH, W, C1)          main row tile of x
    # xh_ref: (1, 1, 2*W, C1)         halo x rows (row above | row below this tile)
    # w1_ref: (C1, c_)  b1_ref: (1, c_)   folded-BN 1x1 conv
    # wdw_ref: (9, c_)  b2_ref: (1, c_)   folded-BN depthwise 3x3 (tap-major)
    # out_ref: (1, TH, W, 2*c_)       fused [y | z] output tile
    # yp_ref:  (TH+2, W+2, c_) f32    zero-bordered y scratch (VMEM)
    _, TH, W, C1 = x_ref.shape
    c_ = w1_ref.shape[1]
    r = pl.program_id(1)
    num_r = pl.num_programs(1)

    def conv1x1_silu(x):
        xf = x.astype(jnp.float32)
        if C1 <= 32 and c_ <= 32:
            # Tiny channel counts: VPU broadcast-FMA; a (C1 x c_) matmul would leave
            # >95% of the MXU idle and add result-FIFO latency for nothing.
            w1v = w1_ref[...]                                     # (C1, c_)
            acc = jnp.zeros(xf.shape[:-1] + (c_,), jnp.float32)
            for i in range(C1):
                acc = acc + xf[..., i:i + 1] * w1v[i:i + 1, :]
        else:
            # MXU path.  Keep TH*W a multiple of 8 so the reshape is layout-free.
            # TODO(synk): cast operands to bf16 on v6e/v7x when accuracy budget allows
            # (keep preferred_element_type=f32).
            lead = xf.shape[:-1]
            rows = math.prod(lead)
            acc = jnp.dot(xf.reshape(rows, C1), w1_ref[...],
                          preferred_element_type=jnp.float32).reshape(lead + (c_,))
        v = acc + b1_ref[...]
        return v * pl.reciprocal(1.0 + jnp.exp(-v), approx=False)   # SiLU

    # ---- primary 1x1 conv (+folded BN, +SiLU); store the y half immediately ----
    y = conv1x1_silu(x_ref[0])                                      # (TH, W, c_) f32
    out_ref[0, :, :, :c_] = y.astype(out_ref.dtype)

    # ---- assemble zero-BORDERED y tile in VMEM scratch (no full-tile memset) ---
    yp_ref[1:TH + 1, 1:W + 1, :] = y
    zcol = jnp.zeros((TH + 2, 1, c_), jnp.float32)
    yp_ref[:, 0:1, :] = zcol
    yp_ref[:, W + 1:W + 2, :] = zcol

    # Halo rows: recompute y for the row just above / below this tile from the
    # prefetched halo x rows; mask to zero at the image border (depthwise pad=1).
    # Written unconditionally every step (scratch is per-core under megacore).
    yh = conv1x1_silu(xh_ref[0, 0])                                 # (2W, c_)
    top_m = (r > 0).astype(jnp.float32)
    bot_m = (r < num_r - 1).astype(jnp.float32)
    yp_ref[0, 1:W + 1, :] = yh[0:W] * top_m
    yp_ref[TH + 1, 1:W + 1, :] = yh[W:2 * W] * bot_m

    # ---- cheap op: depthwise 3x3 (pad=1, folded BN) as 9 shifted VPU MACs ------
    # TODO(synk): the kx (sublane) offsets cost a relayout; a pltpu.roll (XLU) +
    # edge-mask formulation would move the shifts off the VPU path.
    wdw = wdw_ref[...]                                              # (9, c_)
    acc = jnp.zeros((TH, W, c_), jnp.float32)
    for ky in range(3):
        for kx in range(3):
            t = ky * 3 + kx
            acc = acc + yp_ref[ky:ky + TH, kx:kx + W, :] * wdw[t:t + 1, :]
    z = acc + b2_ref[...]
    z = z * pl.reciprocal(1.0 + jnp.exp(-z), approx=False)          # SiLU
    out_ref[0, :, :, c_:] = z.astype(out_ref.dtype)


def _fold_bn(w, gamma, beta, mean, var, eps=1e-5):
    """Fold eval-mode BatchNorm into conv weight/bias. w: (cout, cin_g, kh, kw)."""
    scale = gamma / jnp.sqrt(var + eps)
    return w * scale.reshape(-1, 1, 1, 1), beta - mean * scale


def _pick_row_tile(H, W, C1, c_, itemsize, budget_bytes=8 << 20):
    """Largest divisor of H (prefer multiples of 8) whose double-buffered blocks +
    padded scratch fit a conservative per-step VMEM budget."""
    per_row = 2 * W * (C1 + 2 * c_) * itemsize + (W + 2) * c_ * 4
    max_rows = max(1, budget_bytes // per_row)
    divs = [d for d in range(1, H + 1) if H % d == 0 and d <= max_rows]
    if not divs:
        return 1
    aligned = [d for d in divs if d % 8 == 0]
    return max(aligned) if aligned else max(divs)


def ghostconv_forward(x_nchw, w1, bn1, wdw, bn2, row_tile=None):
    """GhostConv forward (k=1, s=1, dw_size=3, act=SiLU, BN in eval mode).

    x_nchw: (N, C1, H, W); w1: (c_, C1, 1, 1); wdw: (c_, 1, 3, 3);
    bn1, bn2: (gamma, beta, running_mean, running_var).
    Returns (N, 2*c_, H, W) == torch.cat([y, cheap(y)], dim=1).
    """
    N, C1, H, W = x_nchw.shape
    c_ = w1.shape[0]
    dtype = x_nchw.dtype
    itemsize = jnp.dtype(dtype).itemsize

    # Channels-last so the channel dim sits on the 128-lane axis inside the kernel.
    x_nhwc = jnp.transpose(x_nchw, (0, 2, 3, 1))                    # (N, H, W, C1)

    # Fold BN into both convs (mathematically identical in eval mode).
    w1_f, b1_f = _fold_bn(w1, *bn1)
    wdw_f, b2_f = _fold_bn(wdw, *bn2)
    w1_mat = w1_f.reshape(c_, C1).T.astype(jnp.float32)             # (C1, c_)
    wdw_mat = wdw_f.reshape(c_, 9).T.astype(jnp.float32)            # (9, c_) tap-major
    b1_mat = b1_f.reshape(1, c_).astype(jnp.float32)
    b2_mat = b2_f.reshape(1, c_).astype(jnp.float32)

    TH = row_tile if row_tile is not None else _pick_row_tile(H, W, C1, c_, itemsize)
    assert H % TH == 0, "row_tile must divide H"
    R = H // TH

    # Halo x rows (1 above / 1 below each row tile), gathered once (2/TH of x) so
    # the kernel can recompute the halo y rows locally; boundary tiles mask to 0.
    rr = jnp.arange(R)
    x_top = x_nhwc[:, jnp.maximum(rr * TH - 1, 0)]                  # (N, R, W, C1)
    x_bot = x_nhwc[:, jnp.minimum(rr * TH + TH, H - 1)]             # (N, R, W, C1)
    x_halo = jnp.concatenate([x_top, x_bot], axis=2)                # (N, R, 2W, C1)

    # VMEM accounting with headroom; set the limit explicitly so buffering is never
    # silently shrunk (v5e/v6e scoped defaults 16/32 MiB, v7x 64 MiB physical).
    est = (2 * TH * W * (C1 + 2 * c_) * itemsize        # double-buffered x + out blocks
           + 2 * 2 * W * C1 * itemsize                  # double-buffered halo block
           + (TH + 2) * (W + 2) * c_ * 4                # padded y scratch
           + 4 * (C1 * c_ + 11 * c_))                   # weights + biases
    vmem_limit = int(min(max(2 * est + (8 << 20), 32 << 20), 56 << 20))

    flops = N * H * W * c_ * (2 * C1 + 2 * 9 + 8)
    bytes_accessed = int((x_nhwc.size + x_halo.size + N * H * W * 2 * c_) * itemsize
                         + 4 * (C1 * c_ + 11 * c_))

    out_nhwc = pl.pallas_call(
        ghostconv_kernel,
        out_shape=jax.ShapeDtypeStruct((N, H, W, 2 * c_), dtype),
        grid_spec=pltpu.PrefetchScalarGridSpec(
            num_scalar_prefetch=0,
            grid=(N, R),
            in_specs=[
                pl.BlockSpec((1, TH, W, C1), lambda n, r: (n, r, 0, 0)),
                pl.BlockSpec((1, 1, 2 * W, C1), lambda n, r: (n, r, 0, 0)),
                pl.BlockSpec((C1, c_), lambda n, r: (0, 0)),
                pl.BlockSpec((1, c_), lambda n, r: (0, 0)),
                pl.BlockSpec((9, c_), lambda n, r: (0, 0)),
                pl.BlockSpec((1, c_), lambda n, r: (0, 0)),
            ],
            out_specs=pl.BlockSpec((1, TH, W, 2 * c_), lambda n, r: (n, r, 0, 0)),
            scratch_shapes=[pltpu.VMEM((TH + 2, W + 2, c_), jnp.float32)],
        ),
        compiler_params=pltpu.CompilerParams(
            dimension_semantics=("parallel", "parallel"),
            vmem_limit_bytes=vmem_limit),
        cost_estimate=pl.CostEstimate(
            flops=flops,
            transcendentals=2 * N * H * W * c_,
            bytes_accessed=bytes_accessed),
    )(x_nhwc, x_halo, w1_mat, b1_mat, wdw_mat, b2_mat)

    # Fused [y | z] channels in NHWC -> ONE transpose to NCHW == torch.cat(dim=1).
    # TODO(synk): return NHWC directly when the surrounding graph is channels-last.
    return jnp.transpose(out_nhwc, (0, 3, 1, 2))


if __name__ == "__main__":
    # GhostConv(c1=4, c2=8): c_ = 4; primary 1x1 conv, cheap depthwise 3x3 (pad=1).
    N, C1, H, W = 2, 4, 16, 16
    C2 = 8
    c_ = C2 // 2

    key = jax.random.PRNGKey(0)
    ks = jax.random.split(key, 11)

    x = jax.random.normal(ks[0], (N, C1, H, W), dtype=jnp.float32)
    w1 = jax.random.normal(ks[1], (c_, C1, 1, 1), dtype=jnp.float32) * 0.3
    wdw = jax.random.normal(ks[2], (c_, 1, 3, 3), dtype=jnp.float32) * 0.3
    g1 = 1.0 + 0.1 * jax.random.normal(ks[3], (c_,), dtype=jnp.float32)
    be1 = 0.1 * jax.random.normal(ks[4], (c_,), dtype=jnp.float32)
    m1 = 0.1 * jax.random.normal(ks[5], (c_,), dtype=jnp.float32)
    v1 = 1.0 + 0.1 * jnp.abs(jax.random.normal(ks[6], (c_,), dtype=jnp.float32))
    g2 = 1.0 + 0.1 * jax.random.normal(ks[7], (c_,), dtype=jnp.float32)
    be2 = 0.1 * jax.random.normal(ks[8], (c_,), dtype=jnp.float32)
    m2 = 0.1 * jax.random.normal(ks[9], (c_,), dtype=jnp.float32)
    v2 = 1.0 + 0.1 * jnp.abs(jax.random.normal(ks[10], (c_,), dtype=jnp.float32))

    # row_tile=8 -> grid (N, 2): exercises the interior-halo and border-mask paths.
    out = ghostconv_forward(x, w1, (g1, be1, m1, v1), wdw, (g2, be2, m2, v2),
                            row_tile=8)
    out = jax.block_until_ready(out)

    # ---- pure-JAX reference (explicit convs + unfused eval-mode BN + SiLU) ----
    def bn_ref(v, gamma, beta, mean, var, eps=1e-5):
        inv = gamma / jnp.sqrt(var + eps)
        return (v - mean[None, :, None, None]) * inv[None, :, None, None] \
            + beta[None, :, None, None]

    silu = lambda v: v * jax.nn.sigmoid(v)

    y_ref = jax.lax.conv_general_dilated(
        x, w1, (1, 1), "VALID",
        dimension_numbers=("NCHW", "OIHW", "NCHW"),
        precision=jax.lax.Precision.HIGHEST)
    y_ref = silu(bn_ref(y_ref, g1, be1, m1, v1))
    z_ref = jax.lax.conv_general_dilated(
        y_ref, wdw, (1, 1), ((1, 1), (1, 1)),
        dimension_numbers=("NCHW", "OIHW", "NCHW"),
        feature_group_count=c_,
        precision=jax.lax.Precision.HIGHEST)
    z_ref = silu(bn_ref(z_ref, g2, be2, m2, v2))
    ref = jnp.concatenate([y_ref, z_ref], axis=1)

    assert out.shape == (N, C2, H, W)
    max_err = float(jnp.max(jnp.abs(out - ref)))
    assert jnp.allclose(out, ref, atol=1e-4, rtol=1e-4), max_err
    print("KERNEL_OK")
</pallas_src>

<mosaic_0001>
module attributes {stable_mosaic.version = 11 : i64} {
  func.func @ghostconv_kernel(%arg0: i32, %arg1: i32, %arg2: memref<1x8x16x4xf32, #tpu.memory_space<vmem>>, %arg3: memref<1x1x32x4xf32, #tpu.memory_space<vmem>>, %arg4: memref<4x4xf32, #tpu.memory_space<vmem>>, %arg5: memref<1x4xf32, #tpu.memory_space<vmem>>, %arg6: memref<9x4xf32, #tpu.memory_space<vmem>>, %arg7: memref<1x4xf32, #tpu.memory_space<vmem>>, %arg8: memref<1x8x16x8xf32, #tpu.memory_space<vmem>>, %arg9: memref<10x18x4xf32, #tpu.memory_space<vmem>>) attributes {dimension_semantics = [#tpu.dimension_semantics<parallel>, #tpu.dimension_semantics<parallel>], iteration_bounds = array<i64: 2, 2>, scalar_prefetch = 0 : i64, scratch_operands = 1 : i64, tpu.core_type = #tpu.core_type<tc>, window_params = [{transform_indices = @transform_0, window_bounds = array<i64: 1, 8, 16, 4>}, {transform_indices = @transform_1, window_bounds = array<i64: 1, 1, 32, 4>}, {pipeline_mode = #tpu.pipeline_mode<synchronous>, transform_indices = @transform_2, window_bounds = array<i64: 4, 4>}, {pipeline_mode = #tpu.pipeline_mode<synchronous>, transform_indices = @transform_3, window_bounds = array<i64: 1, 4>}, {pipeline_mode = #tpu.pipeline_mode<synchronous>, transform_indices = @transform_4, window_bounds = array<i64: 9, 4>}, {pipeline_mode = #tpu.pipeline_mode<synchronous>, transform_indices = @transform_5, window_bounds = array<i64: 1, 4>}, {transform_indices = @transform_6, window_bounds = array<i64: 1, 8, 16, 8>}]} {
    %c0 = arith.constant 0 : index
    %c0_0 = arith.constant 0 : index
    %c0_1 = arith.constant 0 : index
    %c0_2 = arith.constant 0 : index
    %0 = vector.load %arg2[%c0, %c0_0, %c0_1, %c0_2] : memref<1x8x16x4xf32, #tpu.memory_space<vmem>>, vector<1x8x16x4xf32>
    %1 = vector.shape_cast %0 : vector<1x8x16x4xf32> to vector<8x16x4xf32>
    %c0_3 = arith.constant 0 : index
    %c0_4 = arith.constant 0 : index
    %2 = vector.load %arg4[%c0_3, %c0_4] : memref<4x4xf32, #tpu.memory_space<vmem>>, vector<4x4xf32>
    %cst = arith.constant 0.000000e+00 : f32
    %3 = vector.broadcast %cst : f32 to vector<8x16x4xf32>
    %4 = vector.extract_strided_slice %1 {offsets = [0, 0, 0], sizes = [8, 16, 1], strides = [1, 1, 1]} : vector<8x16x4xf32> to vector<8x16x1xf32>
    %5 = vector.extract_strided_slice %2 {offsets = [0, 0], sizes = [1, 4], strides = [1, 1]} : vector<4x4xf32> to vector<1x4xf32>
    %6 = vector.shape_cast %5 : vector<1x4xf32> to vector<1x1x4xf32>
    %7 = vector.broadcast %4 : vector<8x16x1xf32> to vector<8x16x4xf32>
    %8 = vector.broadcast %6 : vector<1x1x4xf32> to vector<8x16x4xf32>
    %9 = arith.mulf %7, %8 : vector<8x16x4xf32>
    %10 = arith.addf %3, %9 : vector<8x16x4xf32>
    %11 = vector.extract_strided_slice %1 {offsets = [0, 0, 1], sizes = [8, 16, 1], strides = [1, 1, 1]} : vector<8x16x4xf32> to vector<8x16x1xf32>
    %12 = vector.extract_strided_slice %2 {offsets = [1, 0], sizes = [1, 4], strides = [1, 1]} : vector<4x4xf32> to vector<1x4xf32>
    %13 = vector.shape_cast %12 : vector<1x4xf32> to vector<1x1x4xf32>
    %14 = vector.broadcast %11 : vector<8x16x1xf32> to vector<8x16x4xf32>
    %15 = vector.broadcast %13 : vector<1x1x4xf32> to vector<8x16x4xf32>
    %16 = arith.mulf %14, %15 : vector<8x16x4xf32>
    %17 = arith.addf %10, %16 : vector<8x16x4xf32>
    %18 = vector.extract_strided_slice %1 {offsets = [0, 0, 2], sizes = [8, 16, 1], strides = [1, 1, 1]} : vector<8x16x4xf32> to vector<8x16x1xf32>
    %19 = vector.extract_strided_slice %2 {offsets = [2, 0], sizes = [1, 4], strides = [1, 1]} : vector<4x4xf32> to vector<1x4xf32>
    %20 = vector.shape_cast %19 : vector<1x4xf32> to vector<1x1x4xf32>
    %21 = vector.broadcast %18 : vector<8x16x1xf32> to vector<8x16x4xf32>
    %22 = vector.broadcast %20 : vector<1x1x4xf32> to vector<8x16x4xf32>
    %23 = arith.mulf %21, %22 : vector<8x16x4xf32>
    %24 = arith.addf %17, %23 : vector<8x16x4xf32>
    %25 = vector.extract_strided_slice %1 {offsets = [0, 0, 3], sizes = [8, 16, 1], strides = [1, 1, 1]} : vector<8x16x4xf32> to vector<8x16x1xf32>
    %26 = vector.extract_strided_slice %2 {offsets = [3, 0], sizes = [1, 4], strides = [1, 1]} : vector<4x4xf32> to vector<1x4xf32>
    %27 = vector.shape_cast %26 : vector<1x4xf32> to vector<1x1x4xf32>
    %28 = vector.broadcast %25 : vector<8x16x1xf32> to vector<8x16x4xf32>
    %29 = vector.broadcast %27 : vector<1x1x4xf32> to vector<8x16x4xf32>
    %30 = arith.mulf %28, %29 : vector<8x16x4xf32>
    %31 = arith.addf %24, %30 : vector<8x16x4xf32>
    %c0_5 = arith.constant 0 : index
    %c0_6 = arith.constant 0 : index
    %32 = vector.load %arg5[%c0_5, %c0_6] : memref<1x4xf32, #tpu.memory_space<vmem>>, vector<1x4xf32>
    %33 = vector.shape_cast %32 : vector<1x4xf32> to vector<1x1x4xf32>
    %34 = vector.broadcast %33 : vector<1x1x4xf32> to vector<8x16x4xf32>
    %35 = arith.addf %31, %34 : vector<8x16x4xf32>
    %cst_7 = arith.constant 0.000000e+00 : f32
    %36 = vector.broadcast %cst_7 : f32 to vector<8x16x4xf32>
    %37 = arith.subf %36, %35 : vector<8x16x4xf32>
    %38 = math.exp %37 : vector<8x16x4xf32>
    %cst_8 = arith.constant 1.000000e+00 : f32
    %39 = vector.broadcast %cst_8 : f32 to vector<8x16x4xf32>
    %40 = arith.addf %39, %38 : vector<8x16x4xf32>
    %41 = tpu.reciprocal %40 : vector<8x16x4xf32> -> vector<8x16x4xf32>
    %42 = arith.mulf %35, %41 : vector<8x16x4xf32>
    %c0_9 = arith.constant 0 : index
    %c0_10 = arith.constant 0 : index
    %c0_11 = arith.constant 0 : index
    %c0_12 = arith.constant 0 : index
    %43 = vector.load %arg8[%c0_9, %c0_10, %c0_11, %c0_12] : memref<1x8x16x8xf32, #tpu.memory_space<vmem>>, vector<1x8x16x4xf32>
    %44 = vector.shape_cast %43 : vector<1x8x16x4xf32> to vector<8x16x4xf32>
    %45 = vector.shape_cast %42 : vector<8x16x4xf32> to vector<1x8x16x4xf32>
    tpu.vector_store %arg8[%c0_9, %c0_10, %c0_11, %c0_12], %45 {strides = array<i32>} : memref<1x8x16x8xf32, #tpu.memory_space<vmem>>, vector<1x8x16x4xf32>,
    %c1 = arith.constant 1 : index
    %c1_13 = arith.constant 1 : index
    %c0_14 = arith.constant 0 : index
    %46 = vector.load %arg9[%c1, %c1_13, %c0_14] : memref<10x18x4xf32, #tpu.memory_space<vmem>>, vector<8x16x4xf32>
    tpu.vector_store %arg9[%c1, %c1_13, %c0_14], %42 {strides = array<i32>} : memref<10x18x4xf32, #tpu.memory_space<vmem>>, vector<8x16x4xf32>,
    %cst_15 = arith.constant 0.000000e+00 : f32
    %47 = vector.broadcast %cst_15 : f32 to vector<10x1x4xf32>
    %c0_16 = arith.constant 0 : index
    %c0_17 = arith.constant 0 : index
    %c0_18 = arith.constant 0 : index
    %48 = vector.load %arg9[%c0_16, %c0_17, %c0_18] : memref<10x18x4xf32, #tpu.memory_space<vmem>>, vector<10x1x4xf32>
    tpu.vector_store %arg9[%c0_16, %c0_17, %c0_18], %47 {strides = array<i32>} : memref<10x18x4xf32, #tpu.memory_space<vmem>>, vector<10x1x4xf32>,
    %c0_19 = arith.constant 0 : index
    %c17 = arith.constant 17 : index
    %c0_20 = arith.constant 0 : index
    %49 = vector.load %arg9[%c0_19, %c17, %c0_20] : memref<10x18x4xf32, #tpu.memory_space<vmem>>, vector<10x1x4xf32>
    tpu.vector_store %arg9[%c0_19, %c17, %c0_20], %47 {strides = array<i32>} : memref<10x18x4xf32, #tpu.memory_space<vmem>>, vector<10x1x4xf32>,
    %c0_21 = arith.constant 0 : index
    %c0_22 = arith.constant 0 : index
    %c0_23 = arith.constant 0 : index
    %c0_24 = arith.constant 0 : index
    %50 = vector.load %arg3[%c0_21, %c0_22, %c0_23, %c0_24] : memref<1x1x32x4xf32, #tpu.memory_space<vmem>>, vector<1x1x32x4xf32>
    %51 = vector.shape_cast %50 : vector<1x1x32x4xf32> to vector<32x4xf32>
    %c0_25 = arith.constant 0 : index
    %c0_26 = arith.constant 0 : index
    %52 = vector.load %arg4[%c0_25, %c0_26] : memref<4x4xf32, #tpu.memory_space<vmem>>, vector<4x4xf32>
    %cst_27 = arith.constant 0.000000e+00 : f32
    %53 = vector.broadcast %cst_27 : f32 to vector<32x4xf32>
    %54 = vector.extract_strided_slice %51 {offsets = [0, 0], sizes = [32, 1], strides = [1, 1]} : vector<32x4xf32> to vector<32x1xf32>
    %55 = vector.extract_strided_slice %52 {offsets = [0, 0], sizes = [1, 4], strides = [1, 1]} : vector<4x4xf32> to vector<1x4xf32>
    %56 = vector.broadcast %54 : vector<32x1xf32> to vector<32x4xf32>
    %57 = vector.broadcast %55 : vector<1x4xf32> to vector<32x4xf32>
    %58 = arith.mulf %56, %57 : vector<32x4xf32>
    %59 = arith.addf %53, %58 : vector<32x4xf32>
    %60 = vector.extract_strided_slice %51 {offsets = [0, 1], sizes = [32, 1], strides = [1, 1]} : vector<32x4xf32> to vector<32x1xf32>
    %61 = vector.extract_strided_slice %52 {offsets = [1, 0], sizes = [1, 4], strides = [1, 1]} : vector<4x4xf32> to vector<1x4xf32>
    %62 = vector.broadcast %60 : vector<32x1xf32> to vector<32x4xf32>
    %63 = vector.broadcast %61 : vector<1x4xf32> to vector<32x4xf32>
    %64 = arith.mulf %62, %63 : vector<32x4xf32>
    %65 = arith.addf %59, %64 : vector<32x4xf32>
    %66 = vector.extract_strided_slice %51 {offsets = [0, 2], sizes = [32, 1], strides = [1, 1]} : vector<32x4xf32> to vector<32x1xf32>
    %67 = vector.extract_strided_slice %52 {offsets = [2, 0], sizes = [1, 4], strides = [1, 1]} : vector<4x4xf32> to vector<1x4xf32>
    %68 = vector.broadcast %66 : vector<32x1xf32> to vector<32x4xf32>
    %69 = vector.broadcast %67 : vector<1x4xf32> to vector<32x4xf32>
    %70 = arith.mulf %68, %69 : vector<32x4xf32>
    %71 = arith.addf %65, %70 : vector<32x4xf32>
    %72 = vector.extract_strided_slice %51 {offsets = [0, 3], sizes = [32, 1], strides = [1, 1]} : vector<32x4xf32> to vector<32x1xf32>
    %73 = vector.extract_strided_slice %52 {offsets = [3, 0], sizes = [1, 4], strides = [1, 1]} : vector<4x4xf32> to vector<1x4xf32>
    %74 = vector.broadcast %72 : vector<32x1xf32> to vector<32x4xf32>
    %75 = vector.broadcast %73 : vector<1x4xf32> to vector<32x4xf32>
    %76 = arith.mulf %74, %75 : vector<32x4xf32>
    %77 = arith.addf %71, %76 : vector<32x4xf32>
    %c0_28 = arith.constant 0 : index
    %c0_29 = arith.constant 0 : index
    %78 = vector.load %arg5[%c0_28, %c0_29] : memref<1x4xf32, #tpu.memory_space<vmem>>, vector<1x4xf32>
    %79 = vector.broadcast %78 : vector<1x4xf32> to vector<32x4xf32>
    %80 = arith.addf %77, %79 : vector<32x4xf32>
    %cst_30 = arith.constant 0.000000e+00 : f32
    %81 = vector.broadcast %cst_30 : f32 to vector<32x4xf32>
    %82 = arith.subf %81, %80 : vector<32x4xf32>
    %83 = math.exp %82 : vector<32x4xf32>
    %cst_31 = arith.constant 1.000000e+00 : f32
    %84 = vector.broadcast %cst_31 : f32 to vector<32x4xf32>
    %85 = arith.addf %84, %83 : vector<32x4xf32>
    %86 = tpu.reciprocal %85 : vector<32x4xf32> -> vector<32x4xf32>
    %87 = arith.mulf %80, %86 : vector<32x4xf32>
    %c0_i32 = arith.constant 0 : i32
    %88 = arith.cmpi sgt, %arg1, %c0_i32 : i32
    %89 = arith.extui %88 : i1 to i32
    %90 = arith.sitofp %89 : i32 to f32
    %c1_i32 = arith.constant 1 : i32
    %91 = arith.cmpi slt, %arg1, %c1_i32 : i32
    %92 = arith.extui %91 : i1 to i32
    %93 = arith.sitofp %92 : i32 to f32
    %94 = vector.extract_strided_slice %87 {offsets = [0, 0], sizes = [16, 4], strides = [1, 1]} : vector<32x4xf32> to vector<16x4xf32>
    %95 = vector.broadcast %90 : f32 to vector<16x4xf32>
    %96 = arith.mulf %94, %95 : vector<16x4xf32>
    %c0_32 = arith.constant 0 : index
    %c1_33 = arith.constant 1 : index
    %c0_34 = arith.constant 0 : index
    %97 = vector.load %arg9[%c0_32, %c1_33, %c0_34] : memref<10x18x4xf32, #tpu.memory_space<vmem>>, vector<1x16x4xf32>
    %98 = vector.shape_cast %97 : vector<1x16x4xf32> to vector<16x4xf32>
    %99 = vector.shape_cast %96 : vector<16x4xf32> to vector<1x16x4xf32>
    tpu.vector_store %arg9[%c0_32, %c1_33, %c0_34], %99 {strides = array<i32>} : memref<10x18x4xf32, #tpu.memory_space<vmem>>, vector<1x16x4xf32>,
    %100 = vector.extract_strided_slice %87 {offsets = [16, 0], sizes = [16, 4], strides = [1, 1]} : vector<32x4xf32> to vector<16x4xf32>
    %101 = vector.broadcast %93 : f32 to vector<16x4xf32>
    %102 = arith.mulf %100, %101 : vector<16x4xf32>
    %c9 = arith.constant 9 : index
    %c1_35 = arith.constant 1 : index
    %c0_36 = arith.constant 0 : index
    %103 = vector.load %arg9[%c9, %c1_35, %c0_36] : memref<10x18x4xf32, #tpu.memory_space<vmem>>, vector<1x16x4xf32>
    %104 = vector.shape_cast %103 : vector<1x16x4xf32> to vector<16x4xf32>
    %105 = vector.shape_cast %102 : vector<16x4xf32> to vector<1x16x4xf32>
    tpu.vector_store %arg9[%c9, %c1_35, %c0_36], %105 {strides = array<i32>} : memref<10x18x4xf32, #tpu.memory_space<vmem>>, vector<1x16x4xf32>,
    %c0_37 = arith.constant 0 : index
    %c0_38 = arith.constant 0 : index
    %106 = vector.load %arg6[%c0_37, %c0_38] : memref<9x4xf32, #tpu.memory_space<vmem>>, vector<9x4xf32>
    %cst_39 = arith.constant 0.000000e+00 : f32
    %107 = vector.broadcast %cst_39 : f32 to vector<8x16x4xf32>
    %c0_40 = arith.constant 0 : index
    %c0_41 = arith.constant 0 : index
    %c0_42 = arith.constant 0 : index
    %108 = vector.load %arg9[%c0_40, %c0_41, %c0_42] : memref<10x18x4xf32, #tpu.memory_space<vmem>>, vector<8x16x4xf32>
    %109 = vector.extract_strided_slice %106 {offsets = [0, 0], sizes = [1, 4], strides = [1, 1]} : vector<9x4xf32> to vector<1x4xf32>
    %110 = vector.shape_cast %109 : vector<1x4xf32> to vector<1x1x4xf32>
    %111 = vector.broadcast %110 : vector<1x1x4xf32> to vector<8x16x4xf32>
    %112 = arith.mulf %108, %111 : vector<8x16x4xf32>
    %113 = arith.addf %107, %112 : vector<8x16x4xf32>
    %c0_43 = arith.constant 0 : index
    %c1_44 = arith.constant 1 : index
    %c0_45 = arith.constant 0 : index
    %114 = vector.load %arg9[%c0_43, %c1_44, %c0_45] : memref<10x18x4xf32, #tpu.memory_space<vmem>>, vector<8x16x4xf32>
    %115 = vector.extract_strided_slice %106 {offsets = [1, 0], sizes = [1, 4], strides = [1, 1]} : vector<9x4xf32> to vector<1x4xf32>
    %116 = vector.shape_cast %115 : vector<1x4xf32> to vector<1x1x4xf32>
    %117 = vector.broadcast %116 : vector<1x1x4xf32> to vector<8x16x4xf32>
    %118 = arith.mulf %114, %117 : vector<8x16x4xf32>
    %119 = arith.addf %113, %118 : vector<8x16x4xf32>
    %c0_46 = arith.constant 0 : index
    %c2 = arith.constant 2 : index
    %c0_47 = arith.constant 0 : index
    %120 = vector.load %arg9[%c0_46, %c2, %c0_47] : memref<10x18x4xf32, #tpu.memory_space<vmem>>, vector<8x16x4xf32>
    %121 = vector.extract_strided_slice %106 {offsets = [2, 0], sizes = [1, 4], strides = [1, 1]} : vector<9x4xf32> to vector<1x4xf32>
    %122 = vector.shape_cast %121 : vector<1x4xf32> to vector<1x1x4xf32>
    %123 = vector.broadcast %122 : vector<1x1x4xf32> to vector<8x16x4xf32>
    %124 = arith.mulf %120, %123 : vector<8x16x4xf32>
    %125 = arith.addf %119, %124 : vector<8x16x4xf32>
    %c1_48 = arith.constant 1 : index
    %c0_49 = arith.constant 0 : index
    %c0_50 = arith.constant 0 : index
    %126 = vector.load %arg9[%c1_48, %c0_49, %c0_50] : memref<10x18x4xf32, #tpu.memory_space<vmem>>, vector<8x16x4xf32>
    %127 = vector.extract_strided_slice %106 {offsets = [3, 0], sizes = [1, 4], strides = [1, 1]} : vector<9x4xf32> to vector<1x4xf32>
    %128 = vector.shape_cast %127 : vector<1x4xf32> to vector<1x1x4xf32>
    %129 = vector.broadcast %128 : vector<1x1x4xf32> to vector<8x16x4xf32>
    %130 = arith.mulf %126, %129 : vector<8x16x4xf32>
    %131 = arith.addf %125, %130 : vector<8x16x4xf32>
    %c1_51 = arith.constant 1 : index
    %c1_52 = arith.constant 1 : index
    %c0_53 = arith.constant 0 : index
    %132 = vector.load %arg9[%c1_51, %c1_52, %c0_53] : memref<10x18x4xf32, #tpu.memory_space<vmem>>, vector<8x16x4xf32>
    %133 = vector.extract_strided_slice %106 {offsets = [4, 0], sizes = [1, 4], strides = [1, 1]} : vector<9x4xf32> to vector<1x4xf32>
    %134 = vector.shape_cast %133 : vector<1x4xf32> to vector<1x1x4xf32>
    %135 = vector.broadcast %134 : vector<1x1x4xf32> to vector<8x16x4xf32>
    %136 = arith.mulf %132, %135 : vector<8x16x4xf32>
    %137 = arith.addf %131, %136 : vector<8x16x4xf32>
    %c1_54 = arith.constant 1 : index
    %c2_55 = arith.constant 2 : index
    %c0_56 = arith.constant 0 : index
    %138 = vector.load %arg9[%c1_54, %c2_55, %c0_56] : memref<10x18x4xf32, #tpu.memory_space<vmem>>, vector<8x16x4xf32>
    %139 = vector.extract_strided_slice %106 {offsets = [5, 0], sizes = [1, 4], strides = [1, 1]} : vector<9x4xf32> to vector<1x4xf32>
    %140 = vector.shape_cast %139 : vector<1x4xf32> to vector<1x1x4xf32>
    %141 = vector.broadcast %140 : vector<1x1x4xf32> to vector<8x16x4xf32>
    %142 = arith.mulf %138, %141 : vector<8x16x4xf32>
    %143 = arith.addf %137, %142 : vector<8x16x4xf32>
    %c2_57 = arith.constant 2 : index
    %c0_58 = arith.constant 0 : index
    %c0_59 = arith.constant 0 : index
    %144 = vector.load %arg9[%c2_57, %c0_58, %c0_59] : memref<10x18x4xf32, #tpu.memory_space<vmem>>, vector<8x16x4xf32>
    %145 = vector.extract_strided_slice %106 {offsets = [6, 0], sizes = [1, 4], strides = [1, 1]} : vector<9x4xf32> to vector<1x4xf32>
    %146 = vector.shape_cast %145 : vector<1x4xf32> to vector<1x1x4xf32>
    %147 = vector.broadcast %146 : vector<1x1x4xf32> to vector<8x16x4xf32>
    %148 = arith.mulf %144, %147 : vector<8x16x4xf32>
    %149 = arith.addf %143, %148 : vector<8x16x4xf32>
    %c2_60 = arith.constant 2 : index
    %c1_61 = arith.constant 1 : index
    %c0_62 = arith.constant 0 : index
    %150 = vector.load %arg9[%c2_60, %c1_61, %c0_62] : memref<10x18x4xf32, #tpu.memory_space<vmem>>, vector<8x16x4xf32>
    %151 = vector.extract_strided_slice %106 {offsets = [7, 0], sizes = [1, 4], strides = [1, 1]} : vector<9x4xf32> to vector<1x4xf32>
    %152 = vector.shape_cast %151 : vector<1x4xf32> to vector<1x1x4xf32>
    %153 = vector.broadcast %152 : vector<1x1x4xf32> to vector<8x16x4xf32>
    %154 = arith.mulf %150, %153 : vector<8x16x4xf32>
    %155 = arith.addf %149, %154 : vector<8x16x4xf32>
    %c2_63 = arith.constant 2 : index
    %c2_64 = arith.constant 2 : index
    %c0_65 = arith.constant 0 : index
    %156 = vector.load %arg9[%c2_63, %c2_64, %c0_65] : memref<10x18x4xf32, #tpu.memory_space<vmem>>, vector<8x16x4xf32>
    %157 = vector.extract_strided_slice %106 {offsets = [8, 0], sizes = [1, 4], strides = [1, 1]} : vector<9x4xf32> to vector<1x4xf32>
    %158 = vector.shape_cast %157 : vector<1x4xf32> to vector<1x1x4xf32>
    %159 = vector.broadcast %158 : vector<1x1x4xf32> to vector<8x16x4xf32>
    %160 = arith.mulf %156, %159 : vector<8x16x4xf32>
    %161 = arith.addf %155, %160 : vector<8x16x4xf32>
    %c0_66 = arith.constant 0 : index
    %c0_67 = arith.constant 0 : index
    %162 = vector.load %arg7[%c0_66, %c0_67] : memref<1x4xf32, #tpu.memory_space<vmem>>, vector<1x4xf32>
    %163 = vector.shape_cast %162 : vector<1x4xf32> to vector<1x1x4xf32>
    %164 = vector.broadcast %163 : vector<1x1x4xf32> to vector<8x16x4xf32>
    %165 = arith.addf %161, %164 : vector<8x16x4xf32>
    %cst_68 = arith.constant 0.000000e+00 : f32
    %166 = vector.broadcast %cst_68 : f32 to vector<8x16x4xf32>
    %167 = arith.subf %166, %165 : vector<8x16x4xf32>
    %168 = math.exp %167 : vector<8x16x4xf32>
    %cst_69 = arith.constant 1.000000e+00 : f32
    %169 = vector.broadcast %cst_69 : f32 to vector<8x16x4xf32>
    %170 = arith.addf %169, %168 : vector<8x16x4xf32>
    %171 = tpu.reciprocal %170 : vector<8x16x4xf32> -> vector<8x16x4xf32>
    %172 = arith.mulf %165, %171 : vector<8x16x4xf32>
    %c0_70 = arith.constant 0 : index
    %c0_71 = arith.constant 0 : index
    %c0_72 = arith.constant 0 : index
    %c4 = arith.constant 4 : index
    %173 = vector.load %arg8[%c0_70, %c0_71, %c0_72, %c4] : memref<1x8x16x8xf32, #tpu.memory_space<vmem>>, vector<1x8x16x4xf32>
    %174 = vector.shape_cast %173 : vector<1x8x16x4xf32> to vector<8x16x4xf32>
    %175 = vector.shape_cast %172 : vector<8x16x4xf32> to vector<1x8x16x4xf32>
    tpu.vector_store %arg8[%c0_70, %c0_71, %c0_72, %c4], %175 {strides = array<i32>} : memref<1x8x16x8xf32, #tpu.memory_space<vmem>>, vector<1x8x16x4xf32>,
    return
  }
  func.func @transform_0(%arg0: i32, %arg1: i32) -> (i32, i32, i32, i32) {
    %c0_i32 = arith.constant 0 : i32
    %c0_i32_0 = arith.constant 0 : i32
    %c0_i32_1 = arith.constant 0 : i32
    return %arg0, %arg1, %c0_i32, %c0_i32_0 : i32, i32, i32, i32
  }
  func.func @transform_1(%arg0: i32, %arg1: i32) -> (i32, i32, i32, i32) {
    %c0_i32 = arith.constant 0 : i32
    %c0_i32_0 = arith.constant 0 : i32
    %c0_i32_1 = arith.constant 0 : i32
    return %arg0, %arg1, %c0_i32, %c0_i32_0 : i32, i32, i32, i32
  }
  func.func @transform_2(%arg0: i32, %arg1: i32) -> (i32, i32) {
    %c0_i32 = arith.constant 0 : i32
    %c0_i32_0 = arith.constant 0 : i32
    %c0_i32_1 = arith.constant 0 : i32
    return %c0_i32, %c0_i32_0 : i32, i32
  }
  func.func @transform_3(%arg0: i32, %arg1: i32) -> (i32, i32) {
    %c0_i32 = arith.constant 0 : i32
    %c0_i32_0 = arith.constant 0 : i32
    %c0_i32_1 = arith.constant 0 : i32
    return %c0_i32, %c0_i32_0 : i32, i32
  }
  func.func @transform_4(%arg0: i32, %arg1: i32) -> (i32, i32) {
    %c0_i32 = arith.constant 0 : i32
    %c0_i32_0 = arith.constant 0 : i32
    %c0_i32_1 = arith.constant 0 : i32
    return %c0_i32, %c0_i32_0 : i32, i32
  }
  func.func @transform_5(%arg0: i32, %arg1: i32) -> (i32, i32) {
    %c0_i32 = arith.constant 0 : i32
    %c0_i32_0 = arith.constant 0 : i32
    %c0_i32_1 = arith.constant 0 : i32
    return %c0_i32, %c0_i32_0 : i32, i32
  }
  func.func @transform_6(%arg0: i32, %arg1: i32) -> (i32, i32, i32, i32) {
    %c0_i32 = arith.constant 0 : i32
    %c0_i32_0 = arith.constant 0 : i32
    %c0_i32_1 = arith.constant 0 : i32
    return %arg0, %arg1, %c0_i32, %c0_i32_0 : i32, i32, i32, i32
  }
}

</mosaic_0001>

<llo_original>
// kernel: tpu_custom_call.1
$region0: #{tpu_custom_call.1}
  #allocation0 [shape = 'u32[]', space=smem, size = 0x4, offset = 0x4, fixed_abs, tag = 'smem constant byte address 0x4 - core index']
  #allocation1 [shape = 'u32[144,128]{1,0:T(1,128)}', space=vmem, size = 0x12000, scoped, tag = 'internal scratch']
  #allocation2 [shape = 'f32[10,18,4]{2,1,0:T(8,128)}', space=vmem, size = 0x1e000, scoped, tag = 'scratch operand']
  %s0 = inlined_call_operand.vmem [shape: f32[2,16,16,4], index: 0, kind: input, shape index: {}]
  %s1 = inlined_call_operand.vmem [shape: f32[2,2,32,4], index: 1, kind: input, shape index: {}]
  %s2 = inlined_call_operand.vmem [shape: f32[4,4], index: 2, kind: input, shape index: {}]
  %s3 = inlined_call_operand.vmem [shape: f32[1,4], index: 3, kind: input, shape index: {}]
  %s4 = inlined_call_operand.vmem [shape: f32[9,4], index: 4, kind: input, shape index: {}]
  %s5 = inlined_call_operand.vmem [shape: f32[1,4], index: 5, kind: input, shape index: {}]
  %s6 = inlined_call_operand.vmem [shape: f32[2,16,16,8], index: 6, kind: output, shape index: {}]
  %s7 = sld [smem:[#allocation0]]
  $region57: #{tpu_custom_call.1} parent=0
    _
  %s9 = ssub.s32 1, %s7
  %s10 = scalar_select 0, %s9, %s7
  loop: start=0, step=1, limit=6
  $region2: #{tpu_custom_call.1} parent=0 // loop_pre_header
    _
  $region3: #{tpu_custom_call.1} parent=0 // loop_header
    %s12 = sphi 0, %s16
    %p13 = scmp.ge.s32.totalorder %s12, 6
    %s19 = sphi 0, %s31
    %s20 = sphi 0, %s27
    %s21 = sphi 0, %s19
    %s22 = sphi 0, %s20
    %s23 = sphi 0, %s21
    %s24 = sphi 0, %s22
    %s36 = sphi 0, %s38
    %s39 = sphi 0, %s36
    %s40 = sphi 0, %s39
    %s56 = sphi 0, %s40
    %s64 = sphi 0, %s66
    %s67 = sphi 0, %s64
    %s68 = sphi 0, %s67
    %s84 = sphi 0, %s68
    %s88 = sphi 0, %s88
    %s90 = sphi 0, %s88
    %s91 = sphi 0, %s90
    %s105 = sphi 0, %s91
    %s109 = sphi 0, %s109
    %s111 = sphi 0, %s109
    %s112 = sphi 0, %s111
    %s126 = sphi 0, %s112
    %s130 = sphi 0, %s130
    %s132 = sphi 0, %s130
    %s133 = sphi 0, %s132
    %s147 = sphi 0, %s133
    %s151 = sphi 0, %s151
    %s153 = sphi 0, %s151
    %s154 = sphi 0, %s153
    %s168 = sphi 0, %s154
    %s176 = sphi 0, %s178
    %s179 = sphi 0, %s176
    %s180 = sphi 0, %s179
    %s196 = sphi 0, %s180
  $region4: #{tpu_custom_call.1} parent=0 // loop_header_branch
    %15 = sbr.rel (%p13) target = $region8
  $region5: #{tpu_custom_call.1} parent=0 // loop_body
    %s17 = ssub.s32 %s12, 1
    %s18 = ssub.s32 %s12, 2
    %s25 = sadd.s32 1, %s20
    %p26 = scmp.ge.s32.totalorder %s25, 2
    %s27 = scalar_select %p26, 0, %s25
    %s28 = sadd.s32 1, %s19
    %s29 = scalar_select %p26, %s28, %s19
    %p30 = scmp.ge.s32.totalorder %s29, 2
    %s31 = scalar_select %p30, 0, %s29
    %s32 = ssub.s32 %s19, %s31
    %s33 = ssub.s32 %s20, %s27
    %s34 = sor.u32 %s32, %s33
    %p35 = scmp.eq.s32.totalorder %s34, 0
    %s37 = sadd.s32 %s36, 1
    %s38 = scalar_select %p35, %s36, %s37
    %p41 = pneg %p35
    %p42 = scmp.eq.s32.totalorder %s12, 3
    %p43 = por %p41, %p42
    %p44 = scmp.ne.s32.totalorder %s36, %s39
    %p45 = scmp.eq.s32.totalorder %s12, 0
    %p46 = por %p44, %p45
    %p47 = scmp.ne.s32.totalorder %s36, %s39
    %p48 = scmp.eq.s32.totalorder %s17, 3
    %p49 = por %p47, %p48
    %p50 = scmp.ne.s32.totalorder %s39, %s40
    %p51 = scmp.eq.s32.totalorder %s17, 0
    %p52 = por %p50, %p51
    %p53 = scmp.ne.s32.totalorder %s39, %s40
    %p54 = scmp.eq.s32.totalorder %s18, 3
    %p55 = por %p53, %p54
    %p57 = scmp.ne.s32.totalorder %s40, %s56
    %p58 = scmp.eq.s32.totalorder %s18, 0
    %p59 = por %p57, %p58
    %s60 = ssub.s32 %s19, %s31
    %s61 = ssub.s32 %s20, %s27
    %s62 = sor.u32 %s60, %s61
    %p63 = scmp.eq.s32.totalorder %s62, 0
    %s65 = sadd.s32 %s64, 1
    %s66 = scalar_select %p63, %s64, %s65
    %p69 = pneg %p63
    %p70 = scmp.eq.s32.totalorder %s12, 3
    %p71 = por %p69, %p70
    %p72 = scmp.ne.s32.totalorder %s64, %s67
    %p73 = scmp.eq.s32.totalorder %s12, 0
    %p74 = por %p72, %p73
    %p75 = scmp.ne.s32.totalorder %s64, %s67
    %p76 = scmp.eq.s32.totalorder %s17, 3
    %p77 = por %p75, %p76
    %p78 = scmp.ne.s32.totalorder %s67, %s68
    %p79 = scmp.eq.s32.totalorder %s17, 0
    %p80 = por %p78, %p79
    %p81 = scmp.ne.s32.totalorder %s67, %s68
    %p82 = scmp.eq.s32.totalorder %s18, 3
    %p83 = por %p81, %p82
    %p85 = scmp.ne.s32.totalorder %s68, %s84
    %p86 = scmp.eq.s32.totalorder %s18, 0
    %p87 = por %p85, %p86
    %s89 = sadd.s32 %s88, 1
    %p92 = scmp.eq.s32.totalorder %s12, 3
    %p93 = scmp.ne.s32.totalorder %s88, %s90
    %p94 = scmp.eq.s32.totalorder %s12, 0
    %p95 = por %p93, %p94
    %p96 = scmp.ne.s32.totalorder %s88, %s90
    %p97 = scmp.eq.s32.totalorder %s17, 3
    %p98 = por %p96, %p97
    %p99 = scmp.ne.s32.totalorder %s90, %s91
    %p100 = scmp.eq.s32.totalorder %s17, 0
    %p101 = por %p99, %p100
    %p102 = scmp.ne.s32.totalorder %s90, %s91
    %p103 = scmp.eq.s32.totalorder %s18, 3
    %p104 = por %p102, %p103
    %p106 = scmp.ne.s32.totalorder %s91, %s105
    %p107 = scmp.eq.s32.totalorder %s18, 0
    %p108 = por %p106, %p107
    %s110 = sadd.s32 %s109, 1
    %p113 = scmp.eq.s32.totalorder %s12, 3
    %p114 = scmp.ne.s32.totalorder %s109, %s111
    %p115 = scmp.eq.s32.totalorder %s12, 0
    %p116 = por %p114, %p115
    %p117 = scmp.ne.s32.totalorder %s109, %s111
    %p118 = scmp.eq.s32.totalorder %s17, 3
    %p119 = por %p117, %p118
    %p120 = scmp.ne.s32.totalorder %s111, %s112
    %p121 = scmp.eq.s32.totalorder %s17, 0
    %p122 = por %p120, %p121
    %p123 = scmp.ne.s32.totalorder %s111, %s112
    %p124 = scmp.eq.s32.totalorder %s18, 3
    %p125 = por %p123, %p124
    %p127 = scmp.ne.s32.totalorder %s112, %s126
    %p128 = scmp.eq.s32.totalorder %s18, 0
    %p129 = por %p127, %p128
    %s131 = sadd.s32 %s130, 1
    %p134 = scmp.eq.s32.totalorder %s12, 3
    %p135 = scmp.ne.s32.totalorder %s130, %s132
    %p136 = scmp.eq.s32.totalorder %s12, 0
    %p137 = por %p135, %p136
    %p138 = scmp.ne.s32.totalorder %s130, %s132
    %p139 = scmp.eq.s32.totalorder %s17, 3
    %p140 = por %p138, %p139
    %p141 = scmp.ne.s32.totalorder %s132, %s133
    %p142 = scmp.eq.s32.totalorder %s17, 0
    %p143 = por %p141, %p142
    %p144 = scmp.ne.s32.totalorder %s132, %s133
    %p145 = scmp.eq.s32.totalorder %s18, 3
    %p146 = por %p144, %p145
    %p148 = scmp.ne.s32.totalorder %s133, %s147
    %p149 = scmp.eq.s32.totalorder %s18, 0
    %p150 = por %p148, %p149
    %s152 = sadd.s32 %s151, 1
    %p155 = scmp.eq.s32.totalorder %s12, 3
    %p156 = scmp.ne.s32.totalorder %s151, %s153
    %p157 = scmp.eq.s32.totalorder %s12, 0
    %p158 = por %p156, %p157
    %p159 = scmp.ne.s32.totalorder %s151, %s153
    %p160 = scmp.eq.s32.totalorder %s17, 3
    %p161 = por %p159, %p160
    %p162 = scmp.ne.s32.totalorder %s153, %s154
    %p163 = scmp.eq.s32.totalorder %s17, 0
    %p164 = por %p162, %p163
    %p165 = scmp.ne.s32.totalorder %s153, %s154
    %p166 = scmp.eq.s32.totalorder %s18, 3
    %p167 = por %p165, %p166
    %p169 = scmp.ne.s32.totalorder %s154, %s168
    %p170 = scmp.eq.s32.totalorder %s18, 0
    %p171 = por %p169, %p170
    %s172 = ssub.s32 %s19, %s31
    %s173 = ssub.s32 %s20, %s27
    %s174 = sor.u32 %s172, %s173
    %p175 = scmp.eq.s32.totalorder %s174, 0
    %s177 = sadd.s32 %s176, 1
    %s178 = scalar_select %p175, %s176, %s177
    %p181 = pneg %p175
    %p182 = scmp.eq.s32.totalorder %s12, 3
    %p183 = por %p181, %p182
    %p184 = scmp.ne.s32.totalorder %s176, %s179
    %p185 = scmp.eq.s32.totalorder %s12, 0
    %p186 = por %p184, %p185
    %p187 = scmp.ne.s32.totalorder %s176, %s179
    %p188 = scmp.eq.s32.totalorder %s17, 3
    %p189 = por %p187, %p188
    %p190 = scmp.ne.s32.totalorder %s179, %s180
    %p191 = scmp.eq.s32.totalorder %s17, 0
    %p192 = por %p190, %p191
    %p193 = scmp.ne.s32.totalorder %s179, %s180
    %p194 = scmp.eq.s32.totalorder %s18, 3
    %p195 = por %p193, %p194
    %p197 = scmp.ne.s32.totalorder %s180, %s196
    %p198 = scmp.eq.s32.totalorder %s18, 0
    %p199 = por %p197, %p198
    %p200 = scmp.le.s32.totalorder 1, %s12
    %p201 = scmp.lt.s32.totalorder %s12, 5
    %p202 = pnand %p200, %p201
    %p203 = pneg %p202
    // Predicated region
    $region9: #{tpu_custom_call.1} parent=5 // pred_check
      _
    $region10: #{tpu_custom_call.1} parent=5 // pred_check_branch
      %205 = sbr.rel (%p202) target = $region12
    $region11: #{tpu_custom_call.1} parent=5 // pred_region
      %s206 = ssub.s32 %s12, 1
      // Predicated region
      $region13: #{tpu_custom_call.1} parent=11 // pred_check
        %p207 = pneg %p101
      $region14: #{tpu_custom_call.1} parent=11 // pred_check_branch
        %209 = sbr.rel (%p207) target = $region16
      $region15: #{tpu_custom_call.1} parent=11 // pred_region
        _
      $region16: #{tpu_custom_call.1} parent=11 // pred_fallthru
        _
      // Predicated region
      $region17: #{tpu_custom_call.1} parent=11 // pred_check
        %p210 = pneg %p122
      $region18: #{tpu_custom_call.1} parent=11 // pred_check_branch
        %212 = sbr.rel (%p210) target = $region20
      $region19: #{tpu_custom_call.1} parent=11 // pred_region
        _
      $region20: #{tpu_custom_call.1} parent=11 // pred_fallthru
        _
      // Predicated region
      $region21: #{tpu_custom_call.1} parent=11 // pred_check
        %p213 = pneg %p143
      $region22: #{tpu_custom_call.1} parent=11 // pred_check_branch
        %215 = sbr.rel (%p213) target = $region24
      $region23: #{tpu_custom_call.1} parent=11 // pred_region
        _
      $region24: #{tpu_custom_call.1} parent=11 // pred_fallthru
        _
      // Predicated region
      $region25: #{tpu_custom_call.1} parent=11 // pred_check
        %p216 = pneg %p164
      $region26: #{tpu_custom_call.1} parent=11 // pred_check_branch
        %218 = sbr.rel (%p216) target = $region28
      $region27: #{tpu_custom_call.1} parent=11 // pred_region
        _
      $region28: #{tpu_custom_call.1} parent=11 // pred_fallthru
        _
    $region12: #{tpu_custom_call.1} parent=5 // pred_fallthru
      _
    %p219 = scmp.lt.s32.totalorder %s12, 4
    // Predicated region
    $region29: #{tpu_custom_call.1} parent=5 // pred_check
      %p220 = pneg %p219
    $region30: #{tpu_custom_call.1} parent=5 // pred_check_branch
      %222 = sbr.rel (%p220) target = $region32
    $region31: #{tpu_custom_call.1} parent=5 // pred_region
      // Predicated region
      $region33: #{tpu_custom_call.1} parent=31 // pred_check
        %p223 = pneg %p46
      $region34: #{tpu_custom_call.1} parent=31 // pred_check_branch
        %225 = sbr.rel (%p223) target = $region36
      $region35: #{tpu_custom_call.1} parent=31 // pred_region
        %s226 = smul.u32 8, %s20
        %p227 = scmp.lt.s32.totalorder %s19, 1
        %s228 = scalar_select %p227, %s19, 1
        %p229 = scmp.lt.s32.totalorder %s226, 15
        %s230 = scalar_select %p229, %s226, 15
        %s231 = smul.addr %s230, 2
        %s232 = smul.addr %s228, 32
        %s233 = sadd.s32 %s231, %s232
        %s234 = smul.addr %s233, 8
        %s235 = scalar_lea.vmem %s0, %s234
        %s236 = smul.u32 8, %s20
      $region36: #{tpu_custom_call.1} parent=31 // pred_fallthru
        _
      // Predicated region
      $region37: #{tpu_custom_call.1} parent=31 // pred_check
        %p237 = pneg %p74
      $region38: #{tpu_custom_call.1} parent=31 // pred_check_branch
        %239 = sbr.rel (%p237) target = $region40
      $region39: #{tpu_custom_call.1} parent=31 // pred_region
        %p240 = scmp.lt.s32.totalorder %s19, 1
        %s241 = scalar_select %p240, %s19, 1
        %p242 = scmp.lt.s32.totalorder %s20, 1
        %s243 = scalar_select %p242, %s20, 1
        %s244 = smul.addr %s243, 4
        %s245 = smul.addr %s241, 8
        %s246 = sadd.s32 %s244, %s245
        %s247 = smul.addr %s246, 8
        %s248 = scalar_lea.vmem %s1, %s247
      $region40: #{tpu_custom_call.1} parent=31 // pred_fallthru
        _
    $region32: #{tpu_custom_call.1} parent=5 // pred_fallthru
      _
    %p249 = scmp.le.s32.totalorder 1, %s12
    %p250 = scmp.lt.s32.totalorder %s12, 5
    %p251 = pnand %p249, %p250
    %p252 = pneg %p251
    // Predicated region
    $region41: #{tpu_custom_call.1} parent=5 // pred_check
      _
    $region42: #{tpu_custom_call.1} parent=5 // pred_check_branch
      %254 = sbr.rel (%p251) target = $region44
    $region43: #{tpu_custom_call.1} parent=5 // pred_region
      %s255 = ssub.s32 %s12, 1
      %s256 = smul.u32 8, %s22
      %p257 = scmp.lt.s32.totalorder %s21, 1
      %s258 = scalar_select %p257, %s21, 1
      %p259 = scmp.lt.s32.totalorder %s256, 15
      %s260 = scalar_select %p259, %s256, 15
      %s261 = smul.addr %s260, 2
      %s262 = smul.addr %s258, 32
      %s263 = sadd.s32 %s261, %s262
      %s264 = smul.addr %s263, 8
      %s265 = scalar_lea.vmem %s0, %s264
      %p266 = pneg %p52
      %p267 = pneg %p49
      %p268 = scmp.lt.s32.totalorder %s21, 1
      %s269 = scalar_select %p268, %s21, 1
      %p270 = scmp.lt.s32.totalorder %s22, 1
      %s271 = scalar_select %p270, %s22, 1
      %s272 = smul.addr %s271, 4
      %s273 = smul.addr %s269, 8
      %s274 = sadd.s32 %s272, %s273
      %s275 = smul.addr %s274, 8
      %s276 = scalar_lea.vmem %s1, %s275
      %p277 = pneg %p80
      %p278 = pneg %p77
      %p279 = pneg %p101
      %p280 = pneg %p98
      %p281 = pneg %p122
      %p282 = pneg %p119
      %p283 = pneg %p143
      %p284 = pneg %p140
      %p285 = pneg %p164
      %p286 = pneg %p161
      %p287 = pneg %p192
      %p288 = pneg %p189
      %s289 = smul.u32 8, %s22
      %p290 = scmp.lt.s32.totalorder %s21, 1
      %s291 = scalar_select %p290, %s21, 1
      %p292 = scmp.lt.s32.totalorder %s289, 15
      %s293 = scalar_select %p292, %s289, 15
      %s294 = smul.addr %s293, 2
      %s295 = smul.addr %s291, 32
      %s296 = sadd.s32 %s294, %s295
      %s297 = smul.addr %s296, 8
      %s298 = scalar_lea.vmem %s6, %s297
      %s299 = smul.u32 8, %s22
      %p300 = scmp.lt.s32.totalorder %s21, 1
      %s301 = scalar_select %p300, %s21, 1
      %p302 = scmp.lt.s32.totalorder %s299, 15
      %s303 = scalar_select %p302, %s299, 15
      %s304 = smul.addr %s303, 2
      %s305 = smul.addr %s301, 32
      %s306 = sadd.s32 %s304, %s305
      %s307 = smul.addr %s306, 8
      %s308 = scalar_lea.vmem %s0, %s307
      %s309 = smul.u32 8, %s22
      %p310 = scmp.lt.s32.totalorder %s21, 1
      %s311 = scalar_select %p310, %s21, 1
      %p312 = scmp.lt.s32.totalorder %s22, 1
      %s313 = scalar_select %p312, %s22, 1
      %s314 = smul.addr %s313, 4
      %s315 = smul.addr %s311, 8
      %s316 = sadd.s32 %s314, %s315
      %s317 = smul.addr %s316, 8
      %s318 = scalar_lea.vmem %s1, %s317
      %s319 = smul.u32 8, %s22
      %p320 = scmp.lt.s32.totalorder %s21, 1
      %s321 = scalar_select %p320, %s21, 1
      %p322 = scmp.lt.s32.totalorder %s319, 15
      %s323 = scalar_select %p322, %s319, 15
      %s324 = smul.addr %s323, 2
      %s325 = smul.addr %s321, 32
      %s326 = sadd.s32 %s324, %s325
      %s327 = smul.addr %s326, 8
      %s328 = scalar_lea.vmem %s6, %s327
      %s329 = smul.u32 8, %s22
      %v330 = vld [vmem:[%s308] sm:$0xff]
      %v331 = vld [vmem:[%s308 + $0x8] sm:$0xff]
      %v332 = vld [vmem:[%s308 + $0x10] sm:$0xff]
      %v333 = vld [vmem:[%s308 + $0x18] sm:$0xff]
      %v334 = vld [vmem:[%s308 + $0x20] sm:$0xff]
      %v335 = vld [vmem:[%s308 + $0x28] sm:$0xff]
      %v336 = vld [vmem:[%s308 + $0x30] sm:$0xff]
      %v337 = vld [vmem:[%s308 + $0x38] sm:$0xff]
      %v338 = vld [vmem:[%s308 + $0x40] sm:$0xff]
      %v339 = vld [vmem:[%s308 + $0x48] sm:$0xff]
      %v340 = vld [vmem:[%s308 + $0x50] sm:$0xff]
      %v341 = vld [vmem:[%s308 + $0x58] sm:$0xff]
      %v342 = vld [vmem:[%s308 + $0x60] sm:$0xff]
      %v343 = vld [vmem:[%s308 + $0x68] sm:$0xff]
      %v344 = vld [vmem:[%s308 + $0x70] sm:$0xff]
      %v345 = vld [vmem:[%s308 + $0x78] sm:$0xff]
      %v346 = vld [vmem:[%s2] sm:$0xf]
      %348 = vset.pattern.permute.xlu0 0
      %349 = vperm.xlu0 %348, %v330
      %v350 = vpop.permute.xlu0 %349
      %353 = vset.pattern.permute.xlu0 0
      %354 = vperm.xlu0 %353, %v331
      %v355 = vpop.permute.xlu0 %354
      %358 = vset.pattern.permute.xlu0 0
      %359 = vperm.xlu0 %358, %v332
      %v360 = vpop.permute.xlu0 %359
      %363 = vset.pattern.permute.xlu0 0
      %364 = vperm.xlu0 %363, %v333
      %v365 = vpop.permute.xlu0 %364
      %368 = vset.pattern.permute.xlu0 0
      %369 = vperm.xlu0 %368, %v334
      %v370 = vpop.permute.xlu0 %369
      %373 = vset.pattern.permute.xlu0 0
      %374 = vperm.xlu0 %373, %v335
      %v375 = vpop.permute.xlu0 %374
      %378 = vset.pattern.permute.xlu0 0
      %379 = vperm.xlu0 %378, %v336
      %v380 = vpop.permute.xlu0 %379
      %383 = vset.pattern.permute.xlu0 0
      %384 = vperm.xlu0 %383, %v337
      %v385 = vpop.permute.xlu0 %384
      %388 = vset.pattern.permute.xlu0 0
      %389 = vperm.xlu0 %388, %v338
      %v390 = vpop.permute.xlu0 %389
      %393 = vset.pattern.permute.xlu0 0
      %394 = vperm.xlu0 %393, %v339
      %v395 = vpop.permute.xlu0 %394
      %398 = vset.pattern.permute.xlu0 0
      %399 = vperm.xlu0 %398, %v340
      %v400 = vpop.permute.xlu0 %399
      %403 = vset.pattern.permute.xlu0 0
      %404 = vperm.xlu0 %403, %v341
      %v405 = vpop.permute.xlu0 %404
      %408 = vset.pattern.permute.xlu0 0
      %409 = vperm.xlu0 %408, %v342
      %v410 = vpop.permute.xlu0 %409
      %413 = vset.pattern.permute.xlu0 0
      %414 = vperm.xlu0 %413, %v343
      %v415 = vpop.permute.xlu0 %414
      %418 = vset.pattern.permute.xlu0 0
      %419 = vperm.xlu0 %418, %v344
      %v420 = vpop.permute.xlu0 %419
      %423 = vset.pattern.permute.xlu0 0
      %424 = vperm.xlu0 %423, %v345
      %v425 = vpop.permute.xlu0 %424
      %v427 = vlaneseq
      %v428 = vshrl.u32 %v427, 7
      %v429 = vsub.s32 0, %v428
      %v430 = vrot.slane %v346, %v429
      %v431 = vmul.f32 %v350, %v430
      %v432 = vmul.f32 %v355, %v430
      %v433 = vmul.f32 %v360, %v430
      %v434 = vmul.f32 %v365, %v430
      %v435 = vmul.f32 %v370, %v430
      %v436 = vmul.f32 %v375, %v430
      %v437 = vmul.f32 %v380, %v430
      %v438 = vmul.f32 %v385, %v430
      %v439 = vmul.f32 %v390, %v430
      %v440 = vmul.f32 %v395, %v430
      %v441 = vmul.f32 %v400, %v430
      %v442 = vmul.f32 %v405, %v430
      %v443 = vmul.f32 %v410, %v430
      %v444 = vmul.f32 %v415, %v430
      %v445 = vmul.f32 %v420, %v430
      %v446 = vmul.f32 %v425, %v430
      %v447 = vadd.f32 %v431, 0.0
      %v448 = vadd.f32 %v432, 0.0
      %v449 = vadd.f32 %v433, 0.0
      %v450 = vadd.f32 %v434, 0.0
      %v451 = vadd.f32 %v435, 0.0
      %v452 = vadd.f32 %v436, 0.0
      %v453 = vadd.f32 %v437, 0.0
      %v454 = vadd.f32 %v438, 0.0
      %v455 = vadd.f32 %v439, 0.0
      %v456 = vadd.f32 %v440, 0.0
      %v457 = vadd.f32 %v441, 0.0
      %v458 = vadd.f32 %v442, 0.0
      %v459 = vadd.f32 %v443, 0.0
      %v460 = vadd.f32 %v444, 0.0
      %v461 = vadd.f32 %v445, 0.0
      %v462 = vadd.f32 %v446, 0.0
      %463 = vset.pattern.permute.xlu0 1
      %464 = vperm.xlu0 %463, %v330
      %v465 = vpop.permute.xlu0 %464
      %467 = vset.pattern.permute.xlu0 1
      %468 = vperm.xlu0 %467, %v331
      %v469 = vpop.permute.xlu0 %468
      %471 = vset.pattern.permute.xlu0 1
      %472 = vperm.xlu0 %471, %v332
      %v473 = vpop.permute.xlu0 %472
      %475 = vset.pattern.permute.xlu0 1
      %476 = vperm.xlu0 %475, %v333
      %v477 = vpop.permute.xlu0 %476
      %479 = vset.pattern.permute.xlu0 1
      %480 = vperm.xlu0 %479, %v334
      %v481 = vpop.permute.xlu0 %480
      %483 = vset.pattern.permute.xlu0 1
      %484 = vperm.xlu0 %483, %v335
      %v485 = vpop.permute.xlu0 %484
      %487 = vset.pattern.permute.xlu0 1
      %488 = vperm.xlu0 %487, %v336
      %v489 = vpop.permute.xlu0 %488
      %491 = vset.pattern.permute.xlu0 1
      %492 = vperm.xlu0 %491, %v337
      %v493 = vpop.permute.xlu0 %492
      %495 = vset.pattern.permute.xlu0 1
      %496 = vperm.xlu0 %495, %v338
      %v497 = vpop.permute.xlu0 %496
      %499 = vset.pattern.permute.xlu0 1
      %500 = vperm.xlu0 %499, %v339
      %v501 = vpop.permute.xlu0 %500
      %503 = vset.pattern.permute.xlu0 1
      %504 = vperm.xlu0 %503, %v340
      %v505 = vpop.permute.xlu0 %504
      %507 = vset.pattern.permute.xlu0 1
      %508 = vperm.xlu0 %507, %v341
      %v509 = vpop.permute.xlu0 %508
      %511 = vset.pattern.permute.xlu0 1
      %512 = vperm.xlu0 %511, %v342
      %v513 = vpop.permute.xlu0 %512
      %515 = vset.pattern.permute.xlu0 1
      %516 = vperm.xlu0 %515, %v343
      %v517 = vpop.permute.xlu0 %516
      %519 = vset.pattern.permute.xlu0 1
      %520 = vperm.xlu0 %519, %v344
      %v521 = vpop.permute.xlu0 %520
      %523 = vset.pattern.permute.xlu0 1
      %524 = vperm.xlu0 %523, %v345
      %v525 = vpop.permute.xlu0 %524
      %v527 = vlaneseq
      %v528 = vshrl.u32 %v527, 7
      %v529 = vsub.s32 1, %v528
      %v530 = vrot.slane %v346, %v529
      %v531 = vmul.f32 %v465, %v530
      %v532 = vmul.f32 %v469, %v530
      %v533 = vmul.f32 %v473, %v530
      %v534 = vmul.f32 %v477, %v530
      %v535 = vmul.f32 %v481, %v530
      %v536 = vmul.f32 %v485, %v530
      %v537 = vmul.f32 %v489, %v530
      %v538 = vmul.f32 %v493, %v530
      %v539 = vmul.f32 %v497, %v530
      %v540 = vmul.f32 %v501, %v530
      %v541 = vmul.f32 %v505, %v530
      %v542 = vmul.f32 %v509, %v530
      %v543 = vmul.f32 %v513, %v530
      %v544 = vmul.f32 %v517, %v530
      %v545 = vmul.f32 %v521, %v530
      %v546 = vmul.f32 %v525, %v530
      %v547 = vadd.f32 %v447, %v531
      %v548 = vadd.f32 %v448, %v532
      %v549 = vadd.f32 %v449, %v533
      %v550 = vadd.f32 %v450, %v534
      %v551 = vadd.f32 %v451, %v535
      %v552 = vadd.f32 %v452, %v536
      %v553 = vadd.f32 %v453, %v537
      %v554 = vadd.f32 %v454, %v538
      %v555 = vadd.f32 %v455, %v539
      %v556 = vadd.f32 %v456, %v540
      %v557 = vadd.f32 %v457, %v541
      %v558 = vadd.f32 %v458, %v542
      %v559 = vadd.f32 %v459, %v543
      %v560 = vadd.f32 %v460, %v544
      %v561 = vadd.f32 %v461, %v545
      %v562 = vadd.f32 %v462, %v546
      %563 = vset.pattern.permute.xlu0 2
      %564 = vperm.xlu0 %563, %v330
      %v565 = vpop.permute.xlu0 %564
      %567 = vset.pattern.permute.xlu0 2
      %568 = vperm.xlu0 %567, %v331
      %v569 = vpop.permute.xlu0 %568
      %571 = vset.pattern.permute.xlu0 2
      %572 = vperm.xlu0 %571, %v332
      %v573 = vpop.permute.xlu0 %572
      %575 = vset.pattern.permute.xlu0 2
      %576 = vperm.xlu0 %575, %v333
      %v577 = vpop.permute.xlu0 %576
      %579 = vset.pattern.permute.xlu0 2
      %580 = vperm.xlu0 %579, %v334
      %v581 = vpop.permute.xlu0 %580
      %583 = vset.pattern.permute.xlu0 2
      %584 = vperm.xlu0 %583, %v335
      %v585 = vpop.permute.xlu0 %584
      %587 = vset.pattern.permute.xlu0 2
      %588 = vperm.xlu0 %587, %v336
      %v589 = vpop.permute.xlu0 %588
      %591 = vset.pattern.permute.xlu0 2
      %592 = vperm.xlu0 %591, %v337
      %v593 = vpop.permute.xlu0 %592
      %595 = vset.pattern.permute.xlu0 2
      %596 = vperm.xlu0 %595, %v338
      %v597 = vpop.permute.xlu0 %596
      %599 = vset.pattern.permute.xlu0 2
      %600 = vperm.xlu0 %599, %v339
      %v601 = vpop.permute.xlu0 %600
      %603 = vset.pattern.permute.xlu0 2
      %604 = vperm.xlu0 %603, %v340
      %v605 = vpop.permute.xlu0 %604
      %607 = vset.pattern.permute.xlu0 2
      %608 = vperm.xlu0 %607, %v341
      %v609 = vpop.permute.xlu0 %608
      %611 = vset.pattern.permute.xlu0 2
      %612 = vperm.xlu0 %611, %v342
      %v613 = vpop.permute.xlu0 %612
      %615 = vset.pattern.permute.xlu0 2
      %616 = vperm.xlu0 %615, %v343
      %v617 = vpop.permute.xlu0 %616
      %619 = vset.pattern.permute.xlu0 2
      %620 = vperm.xlu0 %619, %v344
      %v621 = vpop.permute.xlu0 %620
      %623 = vset.pattern.permute.xlu0 2
      %624 = vperm.xlu0 %623, %v345
      %v625 = vpop.permute.xlu0 %624
      %v627 = vlaneseq
      %v628 = vshrl.u32 %v627, 7
      %v629 = vsub.s32 2, %v628
      %v630 = vrot.slane %v346, %v629
      %v631 = vmul.f32 %v565, %v630
      %v632 = vmul.f32 %v569, %v630
      %v633 = vmul.f32 %v573, %v630
      %v634 = vmul.f32 %v577, %v630
      %v635 = vmul.f32 %v581, %v630
      %v636 = vmul.f32 %v585, %v630
      %v637 = vmul.f32 %v589, %v630
      %v638 = vmul.f32 %v593, %v630
      %v639 = vmul.f32 %v597, %v630
      %v640 = vmul.f32 %v601, %v630
      %v641 = vmul.f32 %v605, %v630
      %v642 = vmul.f32 %v609, %v630
      %v643 = vmul.f32 %v613, %v630
      %v644 = vmul.f32 %v617, %v630
      %v645 = vmul.f32 %v621, %v630
      %v646 = vmul.f32 %v625, %v630
      %v647 = vadd.f32 %v547, %v631
      %v648 = vadd.f32 %v548, %v632
      %v649 = vadd.f32 %v549, %v633
      %v650 = vadd.f32 %v550, %v634
      %v651 = vadd.f32 %v551, %v635
      %v652 = vadd.f32 %v552, %v636
      %v653 = vadd.f32 %v553, %v637
      %v654 = vadd.f32 %v554, %v638
      %v655 = vadd.f32 %v555, %v639
      %v656 = vadd.f32 %v556, %v640
      %v657 = vadd.f32 %v557, %v641
      %v658 = vadd.f32 %v558, %v642
      %v659 = vadd.f32 %v559, %v643
      %v660 = vadd.f32 %v560, %v644
      %v661 = vadd.f32 %v561, %v645
      %v662 = vadd.f32 %v562, %v646
      %663 = vset.pattern.permute.xlu0 3
      %664 = vperm.xlu0 %663, %v330
      %v665 = vpop.permute.xlu0 %664
      %667 = vset.pattern.permute.xlu0 3
      %668 = vperm.xlu0 %667, %v331
      %v669 = vpop.permute.xlu0 %668
      %671 = vset.pattern.permute.xlu0 3
      %672 = vperm.xlu0 %671, %v332
      %v673 = vpop.permute.xlu0 %672
      %675 = vset.pattern.permute.xlu0 3
      %676 = vperm.xlu0 %675, %v333
      %v677 = vpop.permute.xlu0 %676
      %679 = vset.pattern.permute.xlu0 3
      %680 = vperm.xlu0 %679, %v334
      %v681 = vpop.permute.xlu0 %680
      %683 = vset.pattern.permute.xlu0 3
      %684 = vperm.xlu0 %683, %v335
      %v685 = vpop.permute.xlu0 %684
      %687 = vset.pattern.permute.xlu0 3
      %688 = vperm.xlu0 %687, %v336
      %v689 = vpop.permute.xlu0 %688
      %691 = vset.pattern.permute.xlu0 3
      %692 = vperm.xlu0 %691, %v337
      %v693 = vpop.permute.xlu0 %692
      %695 = vset.pattern.permute.xlu0 3
      %696 = vperm.xlu0 %695, %v338
      %v697 = vpop.permute.xlu0 %696
      %699 = vset.pattern.permute.xlu0 3
      %700 = vperm.xlu0 %699, %v339
      %v701 = vpop.permute.xlu0 %700
      %703 = vset.pattern.permute.xlu0 3
      %704 = vperm.xlu0 %703, %v340
      %v705 = vpop.permute.xlu0 %704
      %707 = vset.pattern.permute.xlu0 3
      %708 = vperm.xlu0 %707, %v341
      %v709 = vpop.permute.xlu0 %708
      %711 = vset.pattern.permute.xlu0 3
      %712 = vperm.xlu0 %711, %v342
      %v713 = vpop.permute.xlu0 %712
      %715 = vset.pattern.permute.xlu0 3
      %716 = vperm.xlu0 %715, %v343
      %v717 = vpop.permute.xlu0 %716
      %719 = vset.pattern.permute.xlu0 3
      %720 = vperm.xlu0 %719, %v344
      %v721 = vpop.permute.xlu0 %720
      %723 = vset.pattern.permute.xlu0 3
      %724 = vperm.xlu0 %723, %v345
      %v725 = vpop.permute.xlu0 %724
      %v727 = vlaneseq
      %v728 = vshrl.u32 %v727, 7
      %v729 = vsub.s32 3, %v728
      %v730 = vrot.slane %v346, %v729
      %v731 = vmul.f32 %v665, %v730
      %v732 = vmul.f32 %v669, %v730
      %v733 = vmul.f32 %v673, %v730
      %v734 = vmul.f32 %v677, %v730
      %v735 = vmul.f32 %v681, %v730
      %v736 = vmul.f32 %v685, %v730
      %v737 = vmul.f32 %v689, %v730
      %v738 = vmul.f32 %v693, %v730
      %v739 = vmul.f32 %v697, %v730
      %v740 = vmul.f32 %v701, %v730
      %v741 = vmul.f32 %v705, %v730
      %v742 = vmul.f32 %v709, %v730
      %v743 = vmul.f32 %v713, %v730
      %v744 = vmul.f32 %v717, %v730
      %v745 = vmul.f32 %v721, %v730
      %v746 = vmul.f32 %v725, %v730
      %v747 = vadd.f32 %v647, %v731
      %v748 = vadd.f32 %v648, %v732
      %v749 = vadd.f32 %v649, %v733
      %v750 = vadd.f32 %v650, %v734
      %v751 = vadd.f32 %v651, %v735
      %v752 = vadd.f32 %v652, %v736
      %v753 = vadd.f32 %v653, %v737
      %v754 = vadd.f32 %v654, %v738
      %v755 = vadd.f32 %v655, %v739
      %v756 = vadd.f32 %v656, %v740
      %v757 = vadd.f32 %v657, %v741
      %v758 = vadd.f32 %v658, %v742
      %v759 = vadd.f32 %v659, %v743
      %v760 = vadd.f32 %v660, %v744
      %v761 = vadd.f32 %v661, %v745
      %v762 = vadd.f32 %v662, %v746
      %v763 = vld [vmem:[%s3] sm:$0x1]
      %v765 = vlaneseq
      %v766 = vshrl.u32 %v765, 7
      %v767 = vsub.s32 0, %v766
      %v768 = vrot.slane %v763, %v767
      %v770 = vadd.f32 %v747, %v768
      %v771 = vadd.f32 %v748, %v768
      %v772 = vadd.f32 %v749, %v768
      %v773 = vadd.f32 %v750, %v768
      %v774 = vadd.f32 %v751, %v768
      %v775 = vadd.f32 %v752, %v768
      %v776 = vadd.f32 %v753, %v768
      %v777 = vadd.f32 %v754, %v768
      %v778 = vadd.f32 %v755, %v768
      %v779 = vadd.f32 %v756, %v768
      %v780 = vadd.f32 %v757, %v768
      %v781 = vadd.f32 %v758, %v768
      %v782 = vadd.f32 %v759, %v768
      %v783 = vadd.f32 %v760, %v768
      %v784 = vadd.f32 %v761, %v768
      %v785 = vadd.f32 %v762, %v768
      %v786 = vsub.f32 0.0, %v770
      %v787 = vsub.f32 0.0, %v771
      %v788 = vsub.f32 0.0, %v772
      %v789 = vsub.f32 0.0, %v773
      %v790 = vsub.f32 0.0, %v774
      %v791 = vsub.f32 0.0, %v775
      %v792 = vsub.f32 0.0, %v776
      %v793 = vsub.f32 0.0, %v777
      %v794 = vsub.f32 0.0, %v778
      %v795 = vsub.f32 0.0, %v779
      %v796 = vsub.f32 0.0, %v780
      %v797 = vsub.f32 0.0, %v781
      %v798 = vsub.f32 0.0, %v782
      %v799 = vsub.f32 0.0, %v783
      %v800 = vsub.f32 0.0, %v784
      %v801 = vsub.f32 0.0, %v785
      %v802 = vmul.f32 %v786, 1.442695
      %v803 = vpow.pop %v802
      %v804 = vmul.f32 %v787, 1.442695
      %v805 = vpow.pop %v804
      %v806 = vmul.f32 %v788, 1.442695
      %v807 = vpow.pop %v806
      %v808 = vmul.f32 %v789, 1.442695
      %v809 = vpow.pop %v808
      %v810 = vmul.f32 %v790, 1.442695
      %v811 = vpow.pop %v810
      %v812 = vmul.f32 %v791, 1.442695
      %v813 = vpow.pop %v812
      %v814 = vmul.f32 %v792, 1.442695
      %v815 = vpow.pop %v814
      %v816 = vmul.f32 %v793, 1.442695
      %v817 = vpow.pop %v816
      %v818 = vmul.f32 %v794, 1.442695
      %v819 = vpow.pop %v818
      %v820 = vmul.f32 %v795, 1.442695
      %v821 = vpow.pop %v820
      %v822 = vmul.f32 %v796, 1.442695
      %v823 = vpow.pop %v822
      %v824 = vmul.f32 %v797, 1.442695
      %v825 = vpow.pop %v824
      %v826 = vmul.f32 %v798, 1.442695
      %v827 = vpow.pop %v826
      %v828 = vmul.f32 %v799, 1.442695
      %v829 = vpow.pop %v828
      %v830 = vmul.f32 %v800, 1.442695
      %v831 = vpow.pop %v830
      %v832 = vmul.f32 %v801, 1.442695
      %v833 = vpow.pop %v832
      %v834 = vadd.f32 %v803, 1.0
      %v835 = vadd.f32 %v805, 1.0
      %v836 = vadd.f32 %v807, 1.0
      %v837 = vadd.f32 %v809, 1.0
      %v838 = vadd.f32 %v811, 1.0
      %v839 = vadd.f32 %v813, 1.0
      %v840 = vadd.f32 %v815, 1.0
      %v841 = vadd.f32 %v817, 1.0
      %v842 = vadd.f32 %v819, 1.0
      %v843 = vadd.f32 %v821, 1.0
      %v844 = vadd.f32 %v823, 1.0
      %v845 = vadd.f32 %v825, 1.0
      %v846 = vadd.f32 %v827, 1.0
      %v847 = vadd.f32 %v829, 1.0
      %v848 = vadd.f32 %v831, 1.0
      %v849 = vadd.f32 %v833, 1.0
      %v850 = vrcp.pop %v834
      %v851 = vrcp.pop %v835
      %v852 = vrcp.pop %v836
      %v853 = vrcp.pop %v837
      %v854 = vrcp.pop %v838
      %v855 = vrcp.pop %v839
      %v856 = vrcp.pop %v840
      %v857 = vrcp.pop %v841
      %v858 = vrcp.pop %v842
      %v859 = vrcp.pop %v843
      %v860 = vrcp.pop %v844
      %v861 = vrcp.pop %v845
      %v862 = vrcp.pop %v846
      %v863 = vrcp.pop %v847
      %v864 = vrcp.pop %v848
      %v865 = vrcp.pop %v849
      %v866 = vmul.f32 %v770, %v850
      %v867 = vmul.f32 %v771, %v851
      %v868 = vmul.f32 %v772, %v852
      %v869 = vmul.f32 %v773, %v853
      %v870 = vmul.f32 %v774, %v854
      %v871 = vmul.f32 %v775, %v855
      %v872 = vmul.f32 %v776, %v856
      %v873 = vmul.f32 %v777, %v857
      %v874 = vmul.f32 %v778, %v858
      %v875 = vmul.f32 %v779, %v859
      %v876 = vmul.f32 %v780, %v860
      %v877 = vmul.f32 %v781, %v861
      %v878 = vmul.f32 %v782, %v862
      %v879 = vmul.f32 %v783, %v863
      %v880 = vmul.f32 %v784, %v864
      %v881 = vmul.f32 %v785, %v865
      %vm882 = vcmask 31744
      %883 = vst.msk [vmem:[%s328] sm:$0xff] %vm882, %v866
      %884 = vst.msk [vmem:[%s328 + $0x8] sm:$0xff] %vm882, %v867
      %885 = vst.msk [vmem:[%s328 + $0x10] sm:$0xff] %vm882, %v868
      %886 = vst.msk [vmem:[%s328 + $0x18] sm:$0xff] %vm882, %v869
      %887 = vst.msk [vmem:[%s328 + $0x20] sm:$0xff] %vm882, %v870
      %888 = vst.msk [vmem:[%s328 + $0x28] sm:$0xff] %vm882, %v871
      %889 = vst.msk [vmem:[%s328 + $0x30] sm:$0xff] %vm882, %v872
      %890 = vst.msk [vmem:[%s328 + $0x38] sm:$0xff] %vm882, %v873
      %891 = vst.msk [vmem:[%s328 + $0x40] sm:$0xff] %vm882, %v874
      %892 = vst.msk [vmem:[%s328 + $0x48] sm:$0xff] %vm882, %v875
      %893 = vst.msk [vmem:[%s328 + $0x50] sm:$0xff] %vm882, %v876
      %894 = vst.msk [vmem:[%s328 + $0x58] sm:$0xff] %vm882, %v877
      %895 = vst.msk [vmem:[%s328 + $0x60] sm:$0xff] %vm882, %v878
      %896 = vst.msk [vmem:[%s328 + $0x68] sm:$0xff] %vm882, %v879
      %897 = vst.msk [vmem:[%s328 + $0x70] sm:$0xff] %vm882, %v880
      %898 = vst.msk [vmem:[%s328 + $0x78] sm:$0xff] %vm882, %v881
      %s899 = scalar_lea.vmem [#allocation2], 24
      %900 = vst.msk [vmem:[%s899 + $0x1] sm:$0xff] %vm882, %v866
      %901 = vst.msk [vmem:[%s899 + $0x9] sm:$0xff] %vm882, %v867
      %902 = vst.msk [vmem:[%s899 + $0x19] sm:$0xff] %vm882, %v868
      %903 = vst.msk [vmem:[%s899 + $0x21] sm:$0xff] %vm882, %v869
      %904 = vst.msk [vmem:[%s899 + $0x31] sm:$0xff] %vm882, %v870
      %905 = vst.msk [vmem:[%s899 + $0x39] sm:$0xff] %vm882, %v871
      %906 = vst.msk [vmem:[%s899 + $0x49] sm:$0xff] %vm882, %v872
      %907 = vst.msk [vmem:[%s899 + $0x51] sm:$0xff] %vm882, %v873
      %908 = vst.msk [vmem:[%s899 + $0x61] sm:$0xff] %vm882, %v874
      %909 = vst.msk [vmem:[%s899 + $0x69] sm:$0xff] %vm882, %v875
      %910 = vst.msk [vmem:[%s899 + $0x79] sm:$0xff] %vm882, %v876
      %911 = vst.msk [vmem:[%s899 + $0x81] sm:$0xff] %vm882, %v877
      %912 = vst.msk [vmem:[%s899 + $0x91] sm:$0xff] %vm882, %v878
      %913 = vst.msk [vmem:[%s899 + $0x99] sm:$0xff] %vm882, %v879
      %914 = vst.msk [vmem:[%s899 + $0xa9] sm:$0xff] %vm882, %v880
      %915 = vst.msk [vmem:[%s899 + $0xb1] sm:$0xff] %vm882, %v881
      %vm916 = vcmask 24576
      %917 = vst.msk [vmem:[#allocation2] sm:$0x1] %vm916, 0.0
      %918 = vst.msk [vmem:[#allocation2 + $0x18] sm:$0x1] %vm916, 0.0
      %919 = vst.msk [vmem:[#allocation2 + $0x30] sm:$0x1] %vm916, 0.0
      %920 = vst.msk [vmem:[#allocation2 + $0x48] sm:$0x1] %vm916, 0.0
      %921 = vst.msk [vmem:[#allocation2 + $0x60] sm:$0x1] %vm916, 0.0
      %922 = vst.msk [vmem:[#allocation2 + $0x78] sm:$0x1] %vm916, 0.0
      %923 = vst.msk [vmem:[#allocation2 + $0x90] sm:$0x1] %vm916, 0.0
      %924 = vst.msk [vmem:[#allocation2 + $0xa8] sm:$0x1] %vm916, 0.0
      %925 = vst.msk [vmem:[#allocation2 + $0xc0] sm:$0x1] %vm916, 0.0
      %926 = vst.msk [vmem:[#allocation2 + $0xd8] sm:$0x1] %vm916, 0.0
      %927 = vst.msk [vmem:[#allocation2 + $0x11] sm:$0x1] %vm916, 0.0
      %928 = vst.msk [vmem:[#allocation2 + $0x29] sm:$0x1] %vm916, 0.0
      %929 = vst.msk [vmem:[#allocation2 + $0x41] sm:$0x1] %vm916, 0.0
      %930 = vst.msk [vmem:[#allocation2 + $0x59] sm:$0x1] %vm916, 0.0
      %931 = vst.msk [vmem:[#allocation2 + $0x71] sm:$0x1] %vm916, 0.0
      %932 = vst.msk [vmem:[#allocation2 + $0x89] sm:$0x1] %vm916, 0.0
      %933 = vst.msk [vmem:[#allocation2 + $0xa1] sm:$0x1] %vm916, 0.0
      %934 = vst.msk [vmem:[#allocation2 + $0xb9] sm:$0x1] %vm916, 0.0
      %935 = vst.msk [vmem:[#allocation2 + $0xd1] sm:$0x1] %vm916, 0.0
      %936 = vst.msk [vmem:[#allocation2 + $0xe9] sm:$0x1] %vm916, 0.0
      %v937 = vld [vmem:[%s318] sm:$0xff]
      %v938 = vld [vmem:[%s318 + $0x8] sm:$0xff]
      %v939 = vld [vmem:[%s318 + $0x10] sm:$0xff]
      %v940 = vld [vmem:[%s318 + $0x18] sm:$0xff]
      %v941 = vld [vmem:[%s2] sm:$0xf]
      %943 = vset.pattern.permute.xlu0 0
      %944 = vperm.xlu0 %943, %v937
      %v945 = vpop.permute.xlu0 %944
      %948 = vset.pattern.permute.xlu0 0
      %949 = vperm.xlu0 %948, %v938
      %v950 = vpop.permute.xlu0 %949
      %953 = vset.pattern.permute.xlu0 0
      %954 = vperm.xlu0 %953, %v939
      %v955 = vpop.permute.xlu0 %954
      %958 = vset.pattern.permute.xlu0 0
      %959 = vperm.xlu0 %958, %v940
      %v960 = vpop.permute.xlu0 %959
      %v962 = vlaneseq
      %v963 = vshrl.u32 %v962, 7
      %v964 = vsub.s32 0, %v963
      %v965 = vrot.slane %v941, %v964
      %v966 = vmul.f32 %v945, %v965
      %v967 = vmul.f32 %v950, %v965
      %v968 = vmul.f32 %v955, %v965
      %v969 = vmul.f32 %v960, %v965
      %v970 = vadd.f32 %v966, 0.0
      %v971 = vadd.f32 %v967, 0.0
      %v972 = vadd.f32 %v968, 0.0
      %v973 = vadd.f32 %v969, 0.0
      %974 = vset.pattern.permute.xlu0 1
      %975 = vperm.xlu0 %974, %v937
      %v976 = vpop.permute.xlu0 %975
      %978 = vset.pattern.permute.xlu0 1
      %979 = vperm.xlu0 %978, %v938
      %v980 = vpop.permute.xlu0 %979
      %982 = vset.pattern.permute.xlu0 1
      %983 = vperm.xlu0 %982, %v939
      %v984 = vpop.permute.xlu0 %983
      %986 = vset.pattern.permute.xlu0 1
      %987 = vperm.xlu0 %986, %v940
      %v988 = vpop.permute.xlu0 %987
      %v990 = vlaneseq
      %v991 = vshrl.u32 %v990, 7
      %v992 = vsub.s32 1, %v991
      %v993 = vrot.slane %v941, %v992
      %v994 = vmul.f32 %v976, %v993
      %v995 = vmul.f32 %v980, %v993
      %v996 = vmul.f32 %v984, %v993
      %v997 = vmul.f32 %v988, %v993
      %v998 = vadd.f32 %v970, %v994
      %v999 = vadd.f32 %v971, %v995
      %v1000 = vadd.f32 %v972, %v996
      %v1001 = vadd.f32 %v973, %v997
      %1002 = vset.pattern.permute.xlu0 2
      %1003 = vperm.xlu0 %1002, %v937
      %v1004 = vpop.permute.xlu0 %1003
      %1006 = vset.pattern.permute.xlu0 2
      %1007 = vperm.xlu0 %1006, %v938
      %v1008 = vpop.permute.xlu0 %1007
      %1010 = vset.pattern.permute.xlu0 2
      %1011 = vperm.xlu0 %1010, %v939
      %v1012 = vpop.permute.xlu0 %1011
      %1014 = vset.pattern.permute.xlu0 2
      %1015 = vperm.xlu0 %1014, %v940
      %v1016 = vpop.permute.xlu0 %1015
      %v1018 = vlaneseq
      %v1019 = vshrl.u32 %v1018, 7
      %v1020 = vsub.s32 2, %v1019
      %v1021 = vrot.slane %v941, %v1020
      %v1022 = vmul.f32 %v1004, %v1021
      %v1023 = vmul.f32 %v1008, %v1021
      %v1024 = vmul.f32 %v1012, %v1021
      %v1025 = vmul.f32 %v1016, %v1021
      %v1026 = vadd.f32 %v998, %v1022
      %v1027 = vadd.f32 %v999, %v1023
      %v1028 = vadd.f32 %v1000, %v1024
      %v1029 = vadd.f32 %v1001, %v1025
      %1030 = vset.pattern.permute.xlu0 3
      %1031 = vperm.xlu0 %1030, %v937
      %v1032 = vpop.permute.xlu0 %1031
      %1034 = vset.pattern.permute.xlu0 3
      %1035 = vperm.xlu0 %1034, %v938
      %v1036 = vpop.permute.xlu0 %1035
      %1038 = vset.pattern.permute.xlu0 3
      %1039 = vperm.xlu0 %1038, %v939
      %v1040 = vpop.permute.xlu0 %1039
      %1042 = vset.pattern.permute.xlu0 3
      %1043 = vperm.xlu0 %1042, %v940
      %v1044 = vpop.permute.xlu0 %1043
      %v1046 = vlaneseq
      %v1047 = vshrl.u32 %v1046, 7
      %v1048 = vsub.s32 3, %v1047
      %v1049 = vrot.slane %v941, %v1048
      %v1050 = vmul.f32 %v1032, %v1049
      %v1051 = vmul.f32 %v1036, %v1049
      %v1052 = vmul.f32 %v1040, %v1049
      %v1053 = vmul.f32 %v1044, %v1049
      %v1054 = vadd.f32 %v1026, %v1050
      %v1055 = vadd.f32 %v1027, %v1051
      %v1056 = vadd.f32 %v1028, %v1052
      %v1057 = vadd.f32 %v1029, %v1053
      %v1058 = vld [vmem:[%s3] sm:$0x1]
      %v1060 = vlaneseq
      %v1061 = vshrl.u32 %v1060, 7
      %v1062 = vsub.s32 0, %v1061
      %v1063 = vrot.slane %v1058, %v1062
      %v1065 = vadd.f32 %v1054, %v1063
      %v1066 = vadd.f32 %v1055, %v1063
      %v1067 = vadd.f32 %v1056, %v1063
      %v1068 = vadd.f32 %v1057, %v1063
      %v1069 = vsub.f32 0.0, %v1065
      %v1070 = vsub.f32 0.0, %v1066
      %v1071 = vsub.f32 0.0, %v1067
      %v1072 = vsub.f32 0.0, %v1068
      %v1073 = vmul.f32 %v1069, 1.442695
      %v1074 = vpow.pop %v1073
      %v1075 = vmul.f32 %v1070, 1.442695
      %v1076 = vpow.pop %v1075
      %v1077 = vmul.f32 %v1071, 1.442695
      %v1078 = vpow.pop %v1077
      %v1079 = vmul.f32 %v1072, 1.442695
      %v1080 = vpow.pop %v1079
      %v1081 = vadd.f32 %v1074, 1.0
      %v1082 = vadd.f32 %v1076, 1.0
      %v1083 = vadd.f32 %v1078, 1.0
      %v1084 = vadd.f32 %v1080, 1.0
      %v1085 = vrcp.pop %v1081
      %v1086 = vrcp.pop %v1082
      %v1087 = vrcp.pop %v1083
      %v1088 = vrcp.pop %v1084
      %v1089 = vmul.f32 %v1065, %v1085
      %v1090 = vmul.f32 %v1066, %v1086
      %v1091 = vmul.f32 %v1067, %v1087
      %v1092 = vmul.f32 %v1068, %v1088
      %p1093 = scmp.gt.s32.totalorder %s22, 0
      %s1094 = scalar_select %p1093, 1, 0
      %s1095 = scvt.s32.f32 %s1094
      %p1096 = scmp.lt.s32.totalorder %s22, 1
      %s1097 = scalar_select %p1096, 1, 0
      %s1098 = scvt.s32.f32 %s1097
      %v1099 = vstv %s1095
      %v1100 = vmul.f32 %v1089, %v1099
      %v1101 = vmul.f32 %v1090, %v1099
      %1102 = vst.msk [vmem:[#allocation2 + $0x1] sm:$0xff] %vm882, %v1100
      %1103 = vst.msk [vmem:[#allocation2 + $0x9] sm:$0xff] %vm882, %v1101
      %v1104 = vstv %s1098
      %v1105 = vmul.f32 %v1091, %v1104
      %v1106 = vmul.f32 %v1092, %v1104
      %s1107 = scalar_lea.vmem [#allocation2], 216
      %1108 = vst.msk [vmem:[%s1107 + $0x1] sm:$0xff] %vm882, %v1105
      %1109 = vst.msk [vmem:[%s1107 + $0x9] sm:$0xff] %vm882, %v1106
      %v1110 = vld [vmem:[%s4] sm:$0xff]
      %v1111 = vld [vmem:[%s4 + $0x8] sm:$0x1]
      %v1112 = vld [vmem:[#allocation2] sm:$0xff]
      %v1113 = vld [vmem:[#allocation2 + $0x8] sm:$0xff]
      %v1114 = vld [vmem:[#allocation2 + $0x18] sm:$0xff]
      %v1115 = vld [vmem:[#allocation2 + $0x20] sm:$0xff]
      %v1116 = vld [vmem:[#allocation2 + $0x30] sm:$0xff]
      %v1117 = vld [vmem:[#allocation2 + $0x38] sm:$0xff]
      %v1118 = vld [vmem:[#allocation2 + $0x48] sm:$0xff]
      %v1119 = vld [vmem:[#allocation2 + $0x50] sm:$0xff]
      %v1120 = vld [vmem:[#allocation2 + $0x60] sm:$0xff]
      %v1121 = vld [vmem:[#allocation2 + $0x68] sm:$0xff]
      %v1122 = vld [vmem:[#allocation2 + $0x78] sm:$0xff]
      %v1123 = vld [vmem:[#allocation2 + $0x80] sm:$0xff]
      %v1124 = vld [vmem:[#allocation2 + $0x90] sm:$0xff]
      %v1125 = vld [vmem:[#allocation2 + $0x98] sm:$0xff]
      %v1126 = vld [vmem:[#allocation2 + $0xa8] sm:$0xff]
      %v1127 = vld [vmem:[#allocation2 + $0xb0] sm:$0xff]
      %v1128 = vlaneseq
      %v1129 = vshrl.u32 %v1128, 7
      %v1130 = vsub.s32 0, %v1129
      %v1131 = vrot.slane %v1110, %v1130
      %v1132 = vmul.f32 %v1112, %v1131
      %v1133 = vmul.f32 %v1113, %v1131
      %v1134 = vmul.f32 %v1114, %v1131
      %v1135 = vmul.f32 %v1115, %v1131
      %v1136 = vmul.f32 %v1116, %v1131
      %v1137 = vmul.f32 %v1117, %v1131
      %v1138 = vmul.f32 %v1118, %v1131
      %v1139 = vmul.f32 %v1119, %v1131
      %v1140 = vmul.f32 %v1120, %v1131
      %v1141 = vmul.f32 %v1121, %v1131
      %v1142 = vmul.f32 %v1122, %v1131
      %v1143 = vmul.f32 %v1123, %v1131
      %v1144 = vmul.f32 %v1124, %v1131
      %v1145 = vmul.f32 %v1125, %v1131
      %v1146 = vmul.f32 %v1126, %v1131
      %v1147 = vmul.f32 %v1127, %v1131
      %v1148 = vadd.f32 %v1132, 0.0
      %v1149 = vadd.f32 %v1133, 0.0
      %v1150 = vadd.f32 %v1134, 0.0
      %v1151 = vadd.f32 %v1135, 0.0
      %v1152 = vadd.f32 %v1136, 0.0
      %v1153 = vadd.f32 %v1137, 0.0
      %v1154 = vadd.f32 %v1138, 0.0
      %v1155 = vadd.f32 %v1139, 0.0
      %v1156 = vadd.f32 %v1140, 0.0
      %v1157 = vadd.f32 %v1141, 0.0
      %v1158 = vadd.f32 %v1142, 0.0
      %v1159 = vadd.f32 %v1143, 0.0
      %v1160 = vadd.f32 %v1144, 0.0
      %v1161 = vadd.f32 %v1145, 0.0
      %v1162 = vadd.f32 %v1146, 0.0
      %v1163 = vadd.f32 %v1147, 0.0
      %v1164 = vld [vmem:[#allocation2 + $0x1] sm:$0xff]
      %v1165 = vld [vmem:[#allocation2 + $0x9] sm:$0xff]
      %v1166 = vld [vmem:[#allocation2 + $0x19] sm:$0xff]
      %v1167 = vld [vmem:[#allocation2 + $0x21] sm:$0xff]
      %v1168 = vld [vmem:[#allocation2 + $0x31] sm:$0xff]
      %v1169 = vld [vmem:[#allocation2 + $0x39] sm:$0xff]
      %v1170 = vld [vmem:[#allocation2 + $0x49] sm:$0xff]
      %v1171 = vld [vmem:[#allocation2 + $0x51] sm:$0xff]
      %v1172 = vld [vmem:[#allocation2 + $0x61] sm:$0xff]
      %v1173 = vld [vmem:[#allocation2 + $0x69] sm:$0xff]
      %v1174 = vld [vmem:[#allocation2 + $0x79] sm:$0xff]
      %v1175 = vld [vmem:[#allocation2 + $0x81] sm:$0xff]
      %v1176 = vld [vmem:[#allocation2 + $0x91] sm:$0xff]
      %v1177 = vld [vmem:[#allocation2 + $0x99] sm:$0xff]
      %v1178 = vld [vmem:[#allocation2 + $0xa9] sm:$0xff]
      %v1179 = vld [vmem:[#allocation2 + $0xb1] sm:$0xff]
      %v1180 = vlaneseq
      %v1181 = vshrl.u32 %v1180, 7
      %v1182 = vsub.s32 1, %v1181
      %v1183 = vrot.slane %v1110, %v1182
      %v1184 = vmul.f32 %v1164, %v1183
      %v1185 = vmul.f32 %v1165, %v1183
      %v1186 = vmul.f32 %v1166, %v1183
      %v1187 = vmul.f32 %v1167, %v1183
      %v1188 = vmul.f32 %v1168, %v1183
      %v1189 = vmul.f32 %v1169, %v1183
      %v1190 = vmul.f32 %v1170, %v1183
      %v1191 = vmul.f32 %v1171, %v1183
      %v1192 = vmul.f32 %v1172, %v1183
      %v1193 = vmul.f32 %v1173, %v1183
      %v1194 = vmul.f32 %v1174, %v1183
      %v1195 = vmul.f32 %v1175, %v1183
      %v1196 = vmul.f32 %v1176, %v1183
      %v1197 = vmul.f32 %v1177, %v1183
      %v1198 = vmul.f32 %v1178, %v1183
      %v1199 = vmul.f32 %v1179, %v1183
      %v1200 = vadd.f32 %v1148, %v1184
      %v1201 = vadd.f32 %v1149, %v1185
      %v1202 = vadd.f32 %v1150, %v1186
      %v1203 = vadd.f32 %v1151, %v1187
      %v1204 = vadd.f32 %v1152, %v1188
      %v1205 = vadd.f32 %v1153, %v1189
      %v1206 = vadd.f32 %v1154, %v1190
      %v1207 = vadd.f32 %v1155, %v1191
      %v1208 = vadd.f32 %v1156, %v1192
      %v1209 = vadd.f32 %v1157, %v1193
      %v1210 = vadd.f32 %v1158, %v1194
      %v1211 = vadd.f32 %v1159, %v1195
      %v1212 = vadd.f32 %v1160, %v1196
      %v1213 = vadd.f32 %v1161, %v1197
      %v1214 = vadd.f32 %v1162, %v1198
      %v1215 = vadd.f32 %v1163, %v1199
      %v1216 = vld [vmem:[#allocation2 + $0x2] sm:$0xff]
      %v1217 = vld [vmem:[#allocation2 + $0xa] sm:$0xff]
      %v1218 = vld [vmem:[#allocation2 + $0x1a] sm:$0xff]
      %v1219 = vld [vmem:[#allocation2 + $0x22] sm:$0xff]
      %v1220 = vld [vmem:[#allocation2 + $0x32] sm:$0xff]
      %v1221 = vld [vmem:[#allocation2 + $0x3a] sm:$0xff]
      %v1222 = vld [vmem:[#allocation2 + $0x4a] sm:$0xff]
      %v1223 = vld [vmem:[#allocation2 + $0x52] sm:$0xff]
      %v1224 = vld [vmem:[#allocation2 + $0x62] sm:$0xff]
      %v1225 = vld [vmem:[#allocation2 + $0x6a] sm:$0xff]
      %v1226 = vld [vmem:[#allocation2 + $0x7a] sm:$0xff]
      %v1227 = vld [vmem:[#allocation2 + $0x82] sm:$0xff]
      %v1228 = vld [vmem:[#allocation2 + $0x92] sm:$0xff]
      %v1229 = vld [vmem:[#allocation2 + $0x9a] sm:$0xff]
      %v1230 = vld [vmem:[#allocation2 + $0xaa] sm:$0xff]
      %v1231 = vld [vmem:[#allocation2 + $0xb2] sm:$0xff]
      %v1232 = vlaneseq
      %v1233 = vshrl.u32 %v1232, 7
      %v1234 = vsub.s32 2, %v1233
      %v1235 = vrot.slane %v1110, %v1234
      %v1236 = vmul.f32 %v1216, %v1235
      %v1237 = vmul.f32 %v1217, %v1235
      %v1238 = vmul.f32 %v1218, %v1235
      %v1239 = vmul.f32 %v1219, %v1235
      %v1240 = vmul.f32 %v1220, %v1235
      %v1241 = vmul.f32 %v1221, %v1235
      %v1242 = vmul.f32 %v1222, %v1235
      %v1243 = vmul.f32 %v1223, %v1235
      %v1244 = vmul.f32 %v1224, %v1235
      %v1245 = vmul.f32 %v1225, %v1235
      %v1246 = vmul.f32 %v1226, %v1235
      %v1247 = vmul.f32 %v1227, %v1235
      %v1248 = vmul.f32 %v1228, %v1235
      %v1249 = vmul.f32 %v1229, %v1235
      %v1250 = vmul.f32 %v1230, %v1235
      %v1251 = vmul.f32 %v1231, %v1235
      %v1252 = vadd.f32 %v1200, %v1236
      %v1253 = vadd.f32 %v1201, %v1237
      %v1254 = vadd.f32 %v1202, %v1238
      %v1255 = vadd.f32 %v1203, %v1239
      %v1256 = vadd.f32 %v1204, %v1240
      %v1257 = vadd.f32 %v1205, %v1241
      %v1258 = vadd.f32 %v1206, %v1242
      %v1259 = vadd.f32 %v1207, %v1243
      %v1260 = vadd.f32 %v1208, %v1244
      %v1261 = vadd.f32 %v1209, %v1245
      %v1262 = vadd.f32 %v1210, %v1246
      %v1263 = vadd.f32 %v1211, %v1247
      %v1264 = vadd.f32 %v1212, %v1248
      %v1265 = vadd.f32 %v1213, %v1249
      %v1266 = vadd.f32 %v1214, %v1250
      %v1267 = vadd.f32 %v1215, %v1251
      %v1268 = vld [vmem:[%s899] sm:$0xff]
      %v1269 = vld [vmem:[%s899 + $0x8] sm:$0xff]
      %v1270 = vld [vmem:[%s899 + $0x18] sm:$0xff]
      %v1271 = vld [vmem:[%s899 + $0x20] sm:$0xff]
      %v1272 = vld [vmem:[%s899 + $0x30] sm:$0xff]
      %v1273 = vld [vmem:[%s899 + $0x38] sm:$0xff]
      %v1274 = vld [vmem:[%s899 + $0x48] sm:$0xff]
      %v1275 = vld [vmem:[%s899 + $0x50] sm:$0xff]
      %v1276 = vld [vmem:[%s899 + $0x60] sm:$0xff]
      %v1277 = vld [vmem:[%s899 + $0x68] sm:$0xff]
      %v1278 = vld [vmem:[%s899 + $0x78] sm:$0xff]
      %v1279 = vld [vmem:[%s899 + $0x80] sm:$0xff]
      %v1280 = vld [vmem:[%s899 + $0x90] sm:$0xff]
      %v1281 = vld [vmem:[%s899 + $0x98] sm:$0xff]
      %v1282 = vld [vmem:[%s899 + $0xa8] sm:$0xff]
      %v1283 = vld [vmem:[%s899 + $0xb0] sm:$0xff]
      %v1284 = vlaneseq
      %v1285 = vshrl.u32 %v1284, 7
      %v1286 = vsub.s32 3, %v1285
      %v1287 = vrot.slane %v1110, %v1286
      %v1288 = vmul.f32 %v1268, %v1287
      %v1289 = vmul.f32 %v1269, %v1287
      %v1290 = vmul.f32 %v1270, %v1287
      %v1291 = vmul.f32 %v1271, %v1287
      %v1292 = vmul.f32 %v1272, %v1287
      %v1293 = vmul.f32 %v1273, %v1287
      %v1294 = vmul.f32 %v1274, %v1287
      %v1295 = vmul.f32 %v1275, %v1287
      %v1296 = vmul.f32 %v1276, %v1287
      %v1297 = vmul.f32 %v1277, %v1287
      %v1298 = vmul.f32 %v1278, %v1287
      %v1299 = vmul.f32 %v1279, %v1287
      %v1300 = vmul.f32 %v1280, %v1287
      %v1301 = vmul.f32 %v1281, %v1287
      %v1302 = vmul.f32 %v1282, %v1287
      %v1303 = vmul.f32 %v1283, %v1287
      %v1304 = vadd.f32 %v1252, %v1288
      %v1305 = vadd.f32 %v1253, %v1289
      %v1306 = vadd.f32 %v1254, %v1290
      %v1307 = vadd.f32 %v1255, %v1291
      %v1308 = vadd.f32 %v1256, %v1292
      %v1309 = vadd.f32 %v1257, %v1293
      %v1310 = vadd.f32 %v1258, %v1294
      %v1311 = vadd.f32 %v1259, %v1295
      %v1312 = vadd.f32 %v1260, %v1296
      %v1313 = vadd.f32 %v1261, %v1297
      %v1314 = vadd.f32 %v1262, %v1298
      %v1315 = vadd.f32 %v1263, %v1299
      %v1316 = vadd.f32 %v1264, %v1300
      %v1317 = vadd.f32 %v1265, %v1301
      %v1318 = vadd.f32 %v1266, %v1302
      %v1319 = vadd.f32 %v1267, %v1303
      %v1320 = vld [vmem:[%s899 + $0x1] sm:$0xff]
      %v1321 = vld [vmem:[%s899 + $0x9] sm:$0xff]
      %v1322 = vld [vmem:[%s899 + $0x19] sm:$0xff]
      %v1323 = vld [vmem:[%s899 + $0x21] sm:$0xff]
      %v1324 = vld [vmem:[%s899 + $0x31] sm:$0xff]
      %v1325 = vld [vmem:[%s899 + $0x39] sm:$0xff]
      %v1326 = vld [vmem:[%s899 + $0x49] sm:$0xff]
      %v1327 = vld [vmem:[%s899 + $0x51] sm:$0xff]
      %v1328 = vld [vmem:[%s899 + $0x61] sm:$0xff]
      %v1329 = vld [vmem:[%s899 + $0x69] sm:$0xff]
      %v1330 = vld [vmem:[%s899 + $0x79] sm:$0xff]
      %v1331 = vld [vmem:[%s899 + $0x81] sm:$0xff]
      %v1332 = vld [vmem:[%s899 + $0x91] sm:$0xff]
      %v1333 = vld [vmem:[%s899 + $0x99] sm:$0xff]
      %v1334 = vld [vmem:[%s899 + $0xa9] sm:$0xff]
      %v1335 = vld [vmem:[%s899 + $0xb1] sm:$0xff]
      %v1336 = vlaneseq
      %v1337 = vshrl.u32 %v1336, 7
      %v1338 = vsub.s32 4, %v1337
      %v1339 = vrot.slane %v1110, %v1338
      %v1340 = vmul.f32 %v1320, %v1339
      %v1341 = vmul.f32 %v1321, %v1339
      %v1342 = vmul.f32 %v1322, %v1339
      %v1343 = vmul.f32 %v1323, %v1339
      %v1344 = vmul.f32 %v1324, %v1339
      %v1345 = vmul.f32 %v1325, %v1339
      %v1346 = vmul.f32 %v1326, %v1339
      %v1347 = vmul.f32 %v1327, %v1339
      %v1348 = vmul.f32 %v1328, %v1339
      %v1349 = vmul.f32 %v1329, %v1339
      %v1350 = vmul.f32 %v1330, %v1339
      %v1351 = vmul.f32 %v1331, %v1339
      %v1352 = vmul.f32 %v1332, %v1339
      %v1353 = vmul.f32 %v1333, %v1339
      %v1354 = vmul.f32 %v1334, %v1339
      %v1355 = vmul.f32 %v1335, %v1339
      %v1356 = vadd.f32 %v1304, %v1340
      %v1357 = vadd.f32 %v1305, %v1341
      %v1358 = vadd.f32 %v1306, %v1342
      %v1359 = vadd.f32 %v1307, %v1343
      %v1360 = vadd.f32 %v1308, %v1344
      %v1361 = vadd.f32 %v1309, %v1345
      %v1362 = vadd.f32 %v1310, %v1346
      %v1363 = vadd.f32 %v1311, %v1347
      %v1364 = vadd.f32 %v1312, %v1348
      %v1365 = vadd.f32 %v1313, %v1349
      %v1366 = vadd.f32 %v1314, %v1350
      %v1367 = vadd.f32 %v1315, %v1351
      %v1368 = vadd.f32 %v1316, %v1352
      %v1369 = vadd.f32 %v1317, %v1353
      %v1370 = vadd.f32 %v1318, %v1354
      %v1371 = vadd.f32 %v1319, %v1355
      %v1372 = vld [vmem:[%s899 + $0x2] sm:$0xff]
      %v1373 = vld [vmem:[%s899 + $0xa] sm:$0xff]
      %v1374 = vld [vmem:[%s899 + $0x1a] sm:$0xff]
      %v1375 = vld [vmem:[%s899 + $0x22] sm:$0xff]
      %v1376 = vld [vmem:[%s899 + $0x32] sm:$0xff]
      %v1377 = vld [vmem:[%s899 + $0x3a] sm:$0xff]
      %v1378 = vld [vmem:[%s899 + $0x4a] sm:$0xff]
      %v1379 = vld [vmem:[%s899 + $0x52] sm:$0xff]
      %v1380 = vld [vmem:[%s899 + $0x62] sm:$0xff]
      %v1381 = vld [vmem:[%s899 + $0x6a] sm:$0xff]
      %v1382 = vld [vmem:[%s899 + $0x7a] sm:$0xff]
      %v1383 = vld [vmem:[%s899 + $0x82] sm:$0xff]
      %v1384 = vld [vmem:[%s899 + $0x92] sm:$0xff]
      %v1385 = vld [vmem:[%s899 + $0x9a] sm:$0xff]
      %v1386 = vld [vmem:[%s899 + $0xaa] sm:$0xff]
      %v1387 = vld [vmem:[%s899 + $0xb2] sm:$0xff]
      %v1388 = vlaneseq
      %v1389 = vshrl.u32 %v1388, 7
      %v1390 = vsub.s32 5, %v1389
      %v1391 = vrot.slane %v1110, %v1390
      %v1392 = vmul.f32 %v1372, %v1391
      %v1393 = vmul.f32 %v1373, %v1391
      %v1394 = vmul.f32 %v1374, %v1391
      %v1395 = vmul.f32 %v1375, %v1391
      %v1396 = vmul.f32 %v1376, %v1391
      %v1397 = vmul.f32 %v1377, %v1391
      %v1398 = vmul.f32 %v1378, %v1391
      %v1399 = vmul.f32 %v1379, %v1391
      %v1400 = vmul.f32 %v1380, %v1391
      %v1401 = vmul.f32 %v1381, %v1391
      %v1402 = vmul.f32 %v1382, %v1391
      %v1403 = vmul.f32 %v1383, %v1391
      %v1404 = vmul.f32 %v1384, %v1391
      %v1405 = vmul.f32 %v1385, %v1391
      %v1406 = vmul.f32 %v1386, %v1391
      %v1407 = vmul.f32 %v1387, %v1391
      %v1408 = vadd.f32 %v1356, %v1392
      %v1409 = vadd.f32 %v1357, %v1393
      %v1410 = vadd.f32 %v1358, %v1394
      %v1411 = vadd.f32 %v1359, %v1395
      %v1412 = vadd.f32 %v1360, %v1396
      %v1413 = vadd.f32 %v1361, %v1397
      %v1414 = vadd.f32 %v1362, %v1398
      %v1415 = vadd.f32 %v1363, %v1399
      %v1416 = vadd.f32 %v1364, %v1400
      %v1417 = vadd.f32 %v1365, %v1401
      %v1418 = vadd.f32 %v1366, %v1402
      %v1419 = vadd.f32 %v1367, %v1403
      %v1420 = vadd.f32 %v1368, %v1404
      %v1421 = vadd.f32 %v1369, %v1405
      %v1422 = vadd.f32 %v1370, %v1406
      %v1423 = vadd.f32 %v1371, %v1407
      %s1424 = scalar_lea.vmem [#allocation2], 48
      %v1425 = vld [vmem:[%s1424] sm:$0xff]
      %v1426 = vld [vmem:[%s1424 + $0x8] sm:$0xff]
      %v1427 = vld [vmem:[%s1424 + $0x18] sm:$0xff]
      %v1428 = vld [vmem:[%s1424 + $0x20] sm:$0xff]
      %v1429 = vld [vmem:[%s1424 + $0x30] sm:$0xff]
      %v1430 = vld [vmem:[%s1424 + $0x38] sm:$0xff]
      %v1431 = vld [vmem:[%s1424 + $0x48] sm:$0xff]
      %v1432 = vld [vmem:[%s1424 + $0x50] sm:$0xff]
      %v1433 = vld [vmem:[%s1424 + $0x60] sm:$0xff]
      %v1434 = vld [vmem:[%s1424 + $0x68] sm:$0xff]
      %v1435 = vld [vmem:[%s1424 + $0x78] sm:$0xff]
      %v1436 = vld [vmem:[%s1424 + $0x80] sm:$0xff]
      %v1437 = vld [vmem:[%s1424 + $0x90] sm:$0xff]
      %v1438 = vld [vmem:[%s1424 + $0x98] sm:$0xff]
      %v1439 = vld [vmem:[%s1424 + $0xa8] sm:$0xff]
      %v1440 = vld [vmem:[%s1424 + $0xb0] sm:$0xff]
      %v1441 = vlaneseq
      %v1442 = vshrl.u32 %v1441, 7
      %v1443 = vsub.s32 6, %v1442
      %v1444 = vrot.slane %v1110, %v1443
      %v1445 = vmul.f32 %v1425, %v1444
      %v1446 = vmul.f32 %v1426, %v1444
      %v1447 = vmul.f32 %v1427, %v1444
      %v1448 = vmul.f32 %v1428, %v1444
      %v1449 = vmul.f32 %v1429, %v1444
      %v1450 = vmul.f32 %v1430, %v1444
      %v1451 = vmul.f32 %v1431, %v1444
      %v1452 = vmul.f32 %v1432, %v1444
      %v1453 = vmul.f32 %v1433, %v1444
      %v1454 = vmul.f32 %v1434, %v1444
      %v1455 = vmul.f32 %v1435, %v1444
      %v1456 = vmul.f32 %v1436, %v1444
      %v1457 = vmul.f32 %v1437, %v1444
      %v1458 = vmul.f32 %v1438, %v1444
      %v1459 = vmul.f32 %v1439, %v1444
      %v1460 = vmul.f32 %v1440, %v1444
      %v1461 = vadd.f32 %v1408, %v1445
      %v1462 = vadd.f32 %v1409, %v1446
      %v1463 = vadd.f32 %v1410, %v1447
      %v1464 = vadd.f32 %v1411, %v1448
      %v1465 = vadd.f32 %v1412, %v1449
      %v1466 = vadd.f32 %v1413, %v1450
      %v1467 = vadd.f32 %v1414, %v1451
      %v1468 = vadd.f32 %v1415, %v1452
      %v1469 = vadd.f32 %v1416, %v1453
      %v1470 = vadd.f32 %v1417, %v1454
      %v1471 = vadd.f32 %v1418, %v1455
      %v1472 = vadd.f32 %v1419, %v1456
      %v1473 = vadd.f32 %v1420, %v1457
      %v1474 = vadd.f32 %v1421, %v1458
      %v1475 = vadd.f32 %v1422, %v1459
      %v1476 = vadd.f32 %v1423, %v1460
      %v1477 = vld [vmem:[%s1424 + $0x1] sm:$0xff]
      %v1478 = vld [vmem:[%s1424 + $0x9] sm:$0xff]
      %v1479 = vld [vmem:[%s1424 + $0x19] sm:$0xff]
      %v1480 = vld [vmem:[%s1424 + $0x21] sm:$0xff]
      %v1481 = vld [vmem:[%s1424 + $0x31] sm:$0xff]
      %v1482 = vld [vmem:[%s1424 + $0x39] sm:$0xff]
      %v1483 = vld [vmem:[%s1424 + $0x49] sm:$0xff]
      %v1484 = vld [vmem:[%s1424 + $0x51] sm:$0xff]
      %v1485 = vld [vmem:[%s1424 + $0x61] sm:$0xff]
      %v1486 = vld [vmem:[%s1424 + $0x69] sm:$0xff]
      %v1487 = vld [vmem:[%s1424 + $0x79] sm:$0xff]
      %v1488 = vld [vmem:[%s1424 + $0x81] sm:$0xff]
      %v1489 = vld [vmem:[%s1424 + $0x91] sm:$0xff]
      %v1490 = vld [vmem:[%s1424 + $0x99] sm:$0xff]
      %v1491 = vld [vmem:[%s1424 + $0xa9] sm:$0xff]
      %v1492 = vld [vmem:[%s1424 + $0xb1] sm:$0xff]
      %v1493 = vlaneseq
      %v1494 = vshrl.u32 %v1493, 7
      %v1495 = vsub.s32 7, %v1494
      %v1496 = vrot.slane %v1110, %v1495
      %v1497 = vmul.f32 %v1477, %v1496
      %v1498 = vmul.f32 %v1478, %v1496
      %v1499 = vmul.f32 %v1479, %v1496
      %v1500 = vmul.f32 %v1480, %v1496
      %v1501 = vmul.f32 %v1481, %v1496
      %v1502 = vmul.f32 %v1482, %v1496
      %v1503 = vmul.f32 %v1483, %v1496
      %v1504 = vmul.f32 %v1484, %v1496
      %v1505 = vmul.f32 %v1485, %v1496
      %v1506 = vmul.f32 %v1486, %v1496
      %v1507 = vmul.f32 %v1487, %v1496
      %v1508 = vmul.f32 %v1488, %v1496
      %v1509 = vmul.f32 %v1489, %v1496
      %v1510 = vmul.f32 %v1490, %v1496
      %v1511 = vmul.f32 %v1491, %v1496
      %v1512 = vmul.f32 %v1492, %v1496
      %v1513 = vadd.f32 %v1461, %v1497
      %v1514 = vadd.f32 %v1462, %v1498
      %v1515 = vadd.f32 %v1463, %v1499
      %v1516 = vadd.f32 %v1464, %v1500
      %v1517 = vadd.f32 %v1465, %v1501
      %v1518 = vadd.f32 %v1466, %v1502
      %v1519 = vadd.f32 %v1467, %v1503
      %v1520 = vadd.f32 %v1468, %v1504
      %v1521 = vadd.f32 %v1469, %v1505
      %v1522 = vadd.f32 %v1470, %v1506
      %v1523 = vadd.f32 %v1471, %v1507
      %v1524 = vadd.f32 %v1472, %v1508
      %v1525 = vadd.f32 %v1473, %v1509
      %v1526 = vadd.f32 %v1474, %v1510
      %v1527 = vadd.f32 %v1475, %v1511
      %v1528 = vadd.f32 %v1476, %v1512
      %v1529 = vld [vmem:[%s1424 + $0x2] sm:$0xff]
      %v1530 = vld [vmem:[%s1424 + $0xa] sm:$0xff]
      %v1531 = vld [vmem:[%s1424 + $0x1a] sm:$0xff]
      %v1532 = vld [vmem:[%s1424 + $0x22] sm:$0xff]
      %v1533 = vld [vmem:[%s1424 + $0x32] sm:$0xff]
      %v1534 = vld [vmem:[%s1424 + $0x3a] sm:$0xff]
      %v1535 = vld [vmem:[%s1424 + $0x4a] sm:$0xff]
      %v1536 = vld [vmem:[%s1424 + $0x52] sm:$0xff]
      %v1537 = vld [vmem:[%s1424 + $0x62] sm:$0xff]
      %v1538 = vld [vmem:[%s1424 + $0x6a] sm:$0xff]
      %v1539 = vld [vmem:[%s1424 + $0x7a] sm:$0xff]
      %v1540 = vld [vmem:[%s1424 + $0x82] sm:$0xff]
      %v1541 = vld [vmem:[%s1424 + $0x92] sm:$0xff]
      %v1542 = vld [vmem:[%s1424 + $0x9a] sm:$0xff]
      %v1543 = vld [vmem:[%s1424 + $0xaa] sm:$0xff]
      %v1544 = vld [vmem:[%s1424 + $0xb2] sm:$0xff]
      %v1545 = vlaneseq
      %v1546 = vshrl.u32 %v1545, 7
      %v1547 = vsub.s32 0, %v1546
      %v1548 = vrot.slane %v1111, %v1547
      %v1549 = vmul.f32 %v1529, %v1548
      %v1550 = vmul.f32 %v1530, %v1548
      %v1551 = vmul.f32 %v1531, %v1548
      %v1552 = vmul.f32 %v1532, %v1548
      %v1553 = vmul.f32 %v1533, %v1548
      %v1554 = vmul.f32 %v1534, %v1548
      %v1555 = vmul.f32 %v1535, %v1548
      %v1556 = vmul.f32 %v1536, %v1548
      %v1557 = vmul.f32 %v1537, %v1548
      %v1558 = vmul.f32 %v1538, %v1548
      %v1559 = vmul.f32 %v1539, %v1548
      %v1560 = vmul.f32 %v1540, %v1548
      %v1561 = vmul.f32 %v1541, %v1548
      %v1562 = vmul.f32 %v1542, %v1548
      %v1563 = vmul.f32 %v1543, %v1548
      %v1564 = vmul.f32 %v1544, %v1548
      %v1565 = vadd.f32 %v1513, %v1549
      %v1566 = vadd.f32 %v1514, %v1550
      %v1567 = vadd.f32 %v1515, %v1551
      %v1568 = vadd.f32 %v1516, %v1552
      %v1569 = vadd.f32 %v1517, %v1553
      %v1570 = vadd.f32 %v1518, %v1554
      %v1571 = vadd.f32 %v1519, %v1555
      %v1572 = vadd.f32 %v1520, %v1556
      %v1573 = vadd.f32 %v1521, %v1557
      %v1574 = vadd.f32 %v1522, %v1558
      %v1575 = vadd.f32 %v1523, %v1559
      %v1576 = vadd.f32 %v1524, %v1560
      %v1577 = vadd.f32 %v1525, %v1561
      %v1578 = vadd.f32 %v1526, %v1562
      %v1579 = vadd.f32 %v1527, %v1563
      %v1580 = vadd.f32 %v1528, %v1564
      %v1581 = vld [vmem:[%s5] sm:$0x1]
      %v1583 = vlaneseq
      %v1584 = vshrl.u32 %v1583, 7
      %v1585 = vsub.s32 0, %v1584
      %v1586 = vrot.slane %v1581, %v1585
      %v1588 = vadd.f32 %v1565, %v1586
      %v1589 = vadd.f32 %v1566, %v1586
      %v1590 = vadd.f32 %v1567, %v1586
      %v1591 = vadd.f32 %v1568, %v1586
      %v1592 = vadd.f32 %v1569, %v1586
      %v1593 = vadd.f32 %v1570, %v1586
      %v1594 = vadd.f32 %v1571, %v1586
      %v1595 = vadd.f32 %v1572, %v1586
      %v1596 = vadd.f32 %v1573, %v1586
      %v1597 = vadd.f32 %v1574, %v1586
      %v1598 = vadd.f32 %v1575, %v1586
      %v1599 = vadd.f32 %v1576, %v1586
      %v1600 = vadd.f32 %v1577, %v1586
      %v1601 = vadd.f32 %v1578, %v1586
      %v1602 = vadd.f32 %v1579, %v1586
      %v1603 = vadd.f32 %v1580, %v1586
      %v1604 = vsub.f32 0.0, %v1588
      %v1605 = vsub.f32 0.0, %v1589
      %v1606 = vsub.f32 0.0, %v1590
      %v1607 = vsub.f32 0.0, %v1591
      %v1608 = vsub.f32 0.0, %v1592
      %v1609 = vsub.f32 0.0, %v1593
      %v1610 = vsub.f32 0.0, %v1594
      %v1611 = vsub.f32 0.0, %v1595
      %v1612 = vsub.f32 0.0, %v1596
      %v1613 = vsub.f32 0.0, %v1597
      %v1614 = vsub.f32 0.0, %v1598
      %v1615 = vsub.f32 0.0, %v1599
      %v1616 = vsub.f32 0.0, %v1600
      %v1617 = vsub.f32 0.0, %v1601
      %v1618 = vsub.f32 0.0, %v1602
      %v1619 = vsub.f32 0.0, %v1603
      %v1620 = vmul.f32 %v1604, 1.442695
      %v1621 = vpow.pop %v1620
      %v1622 = vmul.f32 %v1605, 1.442695
      %v1623 = vpow.pop %v1622
      %v1624 = vmul.f32 %v1606, 1.442695
      %v1625 = vpow.pop %v1624
      %v1626 = vmul.f32 %v1607, 1.442695
      %v1627 = vpow.pop %v1626
      %v1628 = vmul.f32 %v1608, 1.442695
      %v1629 = vpow.pop %v1628
      %v1630 = vmul.f32 %v1609, 1.442695
      %v1631 = vpow.pop %v1630
      %v1632 = vmul.f32 %v1610, 1.442695
      %v1633 = vpow.pop %v1632
      %v1634 = vmul.f32 %v1611, 1.442695
      %v1635 = vpow.pop %v1634
      %v1636 = vmul.f32 %v1612, 1.442695
      %v1637 = vpow.pop %v1636
      %v1638 = vmul.f32 %v1613, 1.442695
      %v1639 = vpow.pop %v1638
      %v1640 = vmul.f32 %v1614, 1.442695
      %v1641 = vpow.pop %v1640
      %v1642 = vmul.f32 %v1615, 1.442695
      %v1643 = vpow.pop %v1642
      %v1644 = vmul.f32 %v1616, 1.442695
      %v1645 = vpow.pop %v1644
      %v1646 = vmul.f32 %v1617, 1.442695
      %v1647 = vpow.pop %v1646
      %v1648 = vmul.f32 %v1618, 1.442695
      %v1649 = vpow.pop %v1648
      %v1650 = vmul.f32 %v1619, 1.442695
      %v1651 = vpow.pop %v1650
      %v1652 = vadd.f32 %v1621, 1.0
      %v1653 = vadd.f32 %v1623, 1.0
      %v1654 = vadd.f32 %v1625, 1.0
      %v1655 = vadd.f32 %v1627, 1.0
      %v1656 = vadd.f32 %v1629, 1.0
      %v1657 = vadd.f32 %v1631, 1.0
      %v1658 = vadd.f32 %v1633, 1.0
      %v1659 = vadd.f32 %v1635, 1.0
      %v1660 = vadd.f32 %v1637, 1.0
      %v1661 = vadd.f32 %v1639, 1.0
      %v1662 = vadd.f32 %v1641, 1.0
      %v1663 = vadd.f32 %v1643, 1.0
      %v1664 = vadd.f32 %v1645, 1.0
      %v1665 = vadd.f32 %v1647, 1.0
      %v1666 = vadd.f32 %v1649, 1.0
      %v1667 = vadd.f32 %v1651, 1.0
      %v1668 = vrcp.pop %v1652
      %v1669 = vrcp.pop %v1653
      %v1670 = vrcp.pop %v1654
      %v1671 = vrcp.pop %v1655
      %v1672 = vrcp.pop %v1656
      %v1673 = vrcp.pop %v1657
      %v1674 = vrcp.pop %v1658
      %v1675 = vrcp.pop %v1659
      %v1676 = vrcp.pop %v1660
      %v1677 = vrcp.pop %v1661
      %v1678 = vrcp.pop %v1662
      %v1679 = vrcp.pop %v1663
      %v1680 = vrcp.pop %v1664
      %v1681 = vrcp.pop %v1665
      %v1682 = vrcp.pop %v1666
      %v1683 = vrcp.pop %v1667
      %v1684 = vmul.f32 %v1588, %v1668
      %v1685 = vmul.f32 %v1589, %v1669
      %v1686 = vmul.f32 %v1590, %v1670
      %v1687 = vmul.f32 %v1591, %v1671
      %v1688 = vmul.f32 %v1592, %v1672
      %v1689 = vmul.f32 %v1593, %v1673
      %v1690 = vmul.f32 %v1594, %v1674
      %v1691 = vmul.f32 %v1595, %v1675
      %v1692 = vmul.f32 %v1596, %v1676
      %v1693 = vmul.f32 %v1597, %v1677
      %v1694 = vmul.f32 %v1598, %v1678
      %v1695 = vmul.f32 %v1599, %v1679
      %v1696 = vmul.f32 %v1600, %v1680
      %v1697 = vmul.f32 %v1601, %v1681
      %v1698 = vmul.f32 %v1602, %v1682
      %v1699 = vmul.f32 %v1603, %v1683
      %1716 = vrot.lane.b32.xlu0 %v1684, 4
      %v1717 = vpop.permute.xlu0 %1716
      %1718 = vrot.lane.b32.xlu0 %v1685, 4
      %v1719 = vpop.permute.xlu0 %1718
      %1720 = vrot.lane.b32.xlu0 %v1686, 4
      %v1721 = vpop.permute.xlu0 %1720
      %1722 = vrot.lane.b32.xlu0 %v1687, 4
      %v1723 = vpop.permute.xlu0 %1722
      %1724 = vrot.lane.b32.xlu0 %v1688, 4
      %v1725 = vpop.permute.xlu0 %1724
      %1726 = vrot.lane.b32.xlu0 %v1689, 4
      %v1727 = vpop.permute.xlu0 %1726
      %1728 = vrot.lane.b32.xlu0 %v1690, 4
      %v1729 = vpop.permute.xlu0 %1728
      %1730 = vrot.lane.b32.xlu0 %v1691, 4
      %v1731 = vpop.permute.xlu0 %1730
      %1732 = vrot.lane.b32.xlu0 %v1692, 4
      %v1733 = vpop.permute.xlu0 %1732
      %1734 = vrot.lane.b32.xlu0 %v1693, 4
      %v1735 = vpop.permute.xlu0 %1734
      %1736 = vrot.lane.b32.xlu0 %v1694, 4
      %v1737 = vpop.permute.xlu0 %1736
      %1738 = vrot.lane.b32.xlu0 %v1695, 4
      %v1739 = vpop.permute.xlu0 %1738
      %1740 = vrot.lane.b32.xlu0 %v1696, 4
      %v1741 = vpop.permute.xlu0 %1740
      %1742 = vrot.lane.b32.xlu0 %v1697, 4
      %v1743 = vpop.permute.xlu0 %1742
      %1744 = vrot.lane.b32.xlu0 %v1698, 4
      %v1745 = vpop.permute.xlu0 %1744
      %1746 = vrot.lane.b32.xlu0 %v1699, 4
      %v1747 = vpop.permute.xlu0 %1746
      %vm1764 = vcmask 64544
      %1765 = vst.msk [vmem:[%s328] sm:$0xff] %vm1764, %v1717
      %1766 = vst.msk [vmem:[%s328 + $0x8] sm:$0xff] %vm1764, %v1719
      %1767 = vst.msk [vmem:[%s328 + $0x10] sm:$0xff] %vm1764, %v1721
      %1768 = vst.msk [vmem:[%s328 + $0x18] sm:$0xff] %vm1764, %v1723
      %1769 = vst.msk [vmem:[%s328 + $0x20] sm:$0xff] %vm1764, %v1725
      %1770 = vst.msk [vmem:[%s328 + $0x28] sm:$0xff] %vm1764, %v1727
      %1771 = vst.msk [vmem:[%s328 + $0x30] sm:$0xff] %vm1764, %v1729
      %1772 = vst.msk [vmem:[%s328 + $0x38] sm:$0xff] %vm1764, %v1731
      %1773 = vst.msk [vmem:[%s328 + $0x40] sm:$0xff] %vm1764, %v1733
      %1774 = vst.msk [vmem:[%s328 + $0x48] sm:$0xff] %vm1764, %v1735
      %1775 = vst.msk [vmem:[%s328 + $0x50] sm:$0xff] %vm1764, %v1737
      %1776 = vst.msk [vmem:[%s328 + $0x58] sm:$0xff] %vm1764, %v1739
      %1777 = vst.msk [vmem:[%s328 + $0x60] sm:$0xff] %vm1764, %v1741
      %1778 = vst.msk [vmem:[%s328 + $0x68] sm:$0xff] %vm1764, %v1743
      %1779 = vst.msk [vmem:[%s328 + $0x70] sm:$0xff] %vm1764, %v1745
      %1780 = vst.msk [vmem:[%s328 + $0x78] sm:$0xff] %vm1764, %v1747
      %s1781 = smul.u32 8, %s22
      %p1782 = scmp.lt.s32.totalorder %s21, 1
      %s1783 = scalar_select %p1782, %s21, 1
      %p1784 = scmp.lt.s32.totalorder %s1781, 15
      %s1785 = scalar_select %p1784, %s1781, 15
      %s1786 = smul.addr %s1785, 2
      %s1787 = smul.addr %s1783, 32
      %s1788 = sadd.s32 %s1786, %s1787
      %s1789 = smul.addr %s1788, 8
      %s1790 = scalar_lea.vmem %s6, %s1789
      // Predicated region
      $region45: #{tpu_custom_call.1} parent=43 // pred_check
        %p1791 = pneg %p189
      $region46: #{tpu_custom_call.1} parent=43 // pred_check_branch
        %1793 = sbr.rel (%p1791) target = $region48
      $region47: #{tpu_custom_call.1} parent=43 // pred_region
        %s1794 = smul.u32 8, %s22
      $region48: #{tpu_custom_call.1} parent=43 // pred_fallthru
        _
    $region44: #{tpu_custom_call.1} parent=5 // pred_fallthru
      _
    %p1795 = scmp.le.s32.totalorder 2, %s12
    // Predicated region
    $region49: #{tpu_custom_call.1} parent=5 // pred_check
      %p1796 = pneg %p1795
    $region50: #{tpu_custom_call.1} parent=5 // pred_check_branch
      %1798 = sbr.rel (%p1796) target = $region52
    $region51: #{tpu_custom_call.1} parent=5 // pred_region
      %s1799 = ssub.s32 %s12, 2
      // Predicated region
      $region53: #{tpu_custom_call.1} parent=51 // pred_check
        %p1800 = pneg %p195
      $region54: #{tpu_custom_call.1} parent=51 // pred_check_branch
        %1802 = sbr.rel (%p1800) target = $region56
      $region55: #{tpu_custom_call.1} parent=51 // pred_region
        %s1803 = smul.u32 8, %s24
        %p1804 = scmp.lt.s32.totalorder %s23, 1
        %s1805 = scalar_select %p1804, %s23, 1
        %p1806 = scmp.lt.s32.totalorder %s1803, 15
        %s1807 = scalar_select %p1806, %s1803, 15
        %s1808 = smul.addr %s1807, 2
        %s1809 = smul.addr %s1805, 32
        %s1810 = sadd.s32 %s1808, %s1809
        %s1811 = smul.addr %s1810, 8
        %s1812 = scalar_lea.vmem %s6, %s1811
      $region56: #{tpu_custom_call.1} parent=51 // pred_fallthru
        _
    $region52: #{tpu_custom_call.1} parent=5 // pred_fallthru
      _
  $region6: #{tpu_custom_call.1} parent=0 // loop_footer
    %s16 = sadd.s32 1, %s12
  $region7: #{tpu_custom_call.1} parent=0 // loop_footer_branch
    %11 = sbr.rel target = $region3
  $region8: #{tpu_custom_call.1} parent=0 // loop_exit
    _

</llo_original>
